<compile_context>
chip_gen: v5e
topology: v5e:2x2
jax: 0.10.0
libtpu: 0.0.40
codegen_flags: <defaults>
</compile_context>

<pallas_src>
import functools

import jax
import jax.numpy as jnp
from jax import lax
from jax.experimental import pallas as pl
from jax.experimental.pallas import tpu as pltpu


# ----------------------------------------------------------------------------- utilities
def _round_up(x, m):
    return (x + m - 1) // m * m


def _row_tile(n, tile_m):
    # Multiple of 8, never larger than the (padded) row count.
    return min(tile_m, _round_up(n, 8))


def _hw_defaults():
    """Generation-aware tiling / VMEM budgets.

    v5e/v6e have 128 MiB VMEM per TensorCore -> bigger row tiles (halves weight
    re-streaming) and a ~96 MiB limit.  v7x has 64 MiB -> smaller row tiles and a
    sub-64 MiB limit so the compiler keeps headroom for its own scratch.
    """
    try:
        vmem = pltpu.get_tpu_info().vmem_capacity_bytes
    except Exception:  # conservative fallback if the query is unavailable
        vmem = 64 * 1024 * 1024
    if vmem >= 128 * 1024 * 1024:
        return dict(tile_m=512, tile_h=512, tile_k=512, tile_n=512,
                    vmem_limit=96 * 1024 * 1024)
    return dict(tile_m=256, tile_h=512, tile_k=512, tile_n=512,
                vmem_limit=48 * 1024 * 1024)


def _layernorm_block(s, gamma, beta, *, eps, d_valid):
    """LayerNorm over the last axis of an f32 block; padded columns (>= d_valid) are
    masked out of the statistics so feature padding never changes the result."""
    d_total = s.shape[-1]
    if d_valid == d_total:
        mean = jnp.mean(s, axis=-1, keepdims=True)
        c = s - mean
        var = jnp.mean(c * c, axis=-1, keepdims=True)
    else:
        mask = lax.broadcasted_iota(jnp.int32, s.shape, s.ndim - 1) < d_valid
        inv_d = 1.0 / d_valid
        mean = jnp.sum(jnp.where(mask, s, 0.0), axis=-1, keepdims=True) * inv_d
        c = s - mean
        var = jnp.sum(jnp.where(mask, c * c, 0.0), axis=-1, keepdims=True) * inv_d
    return gamma * (c * lax.rsqrt(var + eps)) + beta


# ----------------------------------------------------------------------------- QKV projection
def qkv_kernel(x_ref, w_ref, b_ref, o_ref):
    # bf16 operands (cast once in the wrapper), f32 accumulation, bf16 output.
    y = jnp.dot(x_ref[...], w_ref[...], preferred_element_type=jnp.float32)
    o_ref[...] = (y + b_ref[...]).astype(o_ref.dtype)


def qkv_linear(x_bf16, w_t, b, *, tile_m, tile_n, vmem_limit):
    """x (N, Din) bf16 @ w_t (Din, Dout) bf16 + b (Dout,) -> (N, Dout) bf16.
    Row + output-column tiled so the weight is never fully VMEM resident."""
    n, d_in = x_bf16.shape
    d_out = w_t.shape[1]
    kp = _round_up(d_in, 128)
    tn = min(tile_n, _round_up(d_out, 128))
    cols_p = _round_up(_round_up(d_out, 128), tn)
    tm = _row_tile(n, tile_m)
    n_pad = _round_up(n, tm)

    xp = jnp.pad(x_bf16, ((0, n_pad - n), (0, kp - d_in)))
    wp = jnp.pad(w_t, ((0, kp - d_in), (0, cols_p - d_out)))
    bp = jnp.pad(b, (0, cols_p - d_out)).reshape(1, cols_p)

    # TODO(synk): for very large d_model the contraction axis should also be tiled
    #             (same accumulator pattern as the output-projection kernel below).
    out = pl.pallas_call(
        qkv_kernel,
        out_shape=jax.ShapeDtypeStruct((n_pad, cols_p), jnp.bfloat16),
        grid_spec=pltpu.PrefetchScalarGridSpec(
            num_scalar_prefetch=0,
            grid=(n_pad // tm, cols_p // tn),
            in_specs=[
                pl.BlockSpec((tm, kp), lambda i, j: (i, 0)),
                pl.BlockSpec((kp, tn), lambda i, j: (0, j)),
                pl.BlockSpec((1, tn), lambda i, j: (0, j)),
            ],
            out_specs=pl.BlockSpec((tm, tn), lambda i, j: (i, j)),
        ),
        compiler_params=pltpu.CompilerParams(
            dimension_semantics=("parallel", "parallel"),
            vmem_limit_bytes=vmem_limit,
        ),
    )(xp, wp, bp)
    return out[:n, :d_out]


# ----------------------------------------------------------------------------- attention
def attention_kernel(q_ref, k_ref, v_ref, o_ref, *, scale):
    q = q_ref[...]                                   # (Hb, S, Dh) bf16
    k = k_ref[...]
    v = v_ref[...]
    # scores = q @ k^T / sqrt(d_k): bf16 operands on the MXU, f32 accumulation.
    s = jnp.einsum("bqd,bkd->bqk", q, k,
                   preferred_element_type=jnp.float32) * scale
    s = s - jnp.max(s, axis=-1, keepdims=True)       # stable softmax, f32 elementwise
    p = jnp.exp(s)
    denom = jnp.sum(p, axis=-1, keepdims=True)
    p = p * pl.reciprocal(denom, approx=True)        # EUP slot instead of VALU divide
    o_ref[...] = jnp.einsum("bqk,bkd->bqd", p.astype(jnp.bfloat16), v,
                            preferred_element_type=jnp.float32).astype(o_ref.dtype)


def _head_block(bh, s_len, d_h, budget_bytes=4 * 1024 * 1024):
    # q,k,v,out (bf16) + ~2x f32 score temporaries per head; clamp to a divisor of bh.
    per_head = 4 * s_len * d_h * 2 + 2 * s_len * s_len * 4
    hb = max(1, min(bh, budget_bytes // max(per_head, 1)))
    while bh % hb:
        hb -= 1
    return hb


def scaled_dot_product_attention(q, k, v, *, vmem_limit):
    """q, k, v: (B*H, S, Dh) bf16 -> values (B*H, S, Dh) bf16.  mask=None path only."""
    bh, s_len, d_h = q.shape
    hb = _head_block(bh, s_len, d_h)
    scale = 1.0 / (d_h ** 0.5)
    kern = functools.partial(attention_kernel, scale=scale)
    spec = pl.BlockSpec((hb, s_len, d_h), lambda i: (i, 0, 0))
    return pl.pallas_call(
        kern,
        out_shape=jax.ShapeDtypeStruct((bh, s_len, d_h), jnp.bfloat16),
        grid_spec=pltpu.PrefetchScalarGridSpec(
            num_scalar_prefetch=0,
            grid=(bh // hb,),
            in_specs=[spec, spec, spec],
            out_specs=spec,
        ),
        compiler_params=pltpu.CompilerParams(
            dimension_semantics=("parallel",),
            vmem_limit_bytes=vmem_limit,
        ),
    )(q, k, v)


# ----------------------------------------------------------------------------- out-proj + norm1
def proj_addnorm_kernel(v_ref, w_ref, b_ref, res_ref, g_ref, be_ref, o_ref, acc_ref,
                        *, eps, d_valid):
    """values @ W_o^T (contraction tiled, f32 accumulator), then fused
    + bias + residual + LayerNorm in the finalize step (dropout == identity)."""
    k = pl.program_id(1)

    @pl.when(k == 0)
    def _():
        acc_ref[...] = jnp.zeros_like(acc_ref)

    acc_ref[...] += jnp.dot(v_ref[...], w_ref[...], preferred_element_type=jnp.float32)

    @pl.when(k == pl.num_programs(1) - 1)
    def _():
        s = acc_ref[...] + b_ref[...] + res_ref[...]
        y = _layernorm_block(s, g_ref[...], be_ref[...], eps=eps, d_valid=d_valid)
        o_ref[...] = y.astype(o_ref.dtype)


def attn_out_proj_addnorm(values_bf16, w_o_t, b_o, residual_f32, gamma, beta,
                          *, eps, tile_m, tile_k, vmem_limit):
    n, d_model = residual_f32.shape
    dp = _round_up(d_model, 128)
    tk = min(tile_k, dp)
    kp = _round_up(dp, tk)
    tm = _row_tile(n, tile_m)
    n_pad = _round_up(n, tm)

    vp = jnp.pad(values_bf16, ((0, n_pad - n), (0, kp - d_model)))
    wp = jnp.pad(w_o_t, ((0, kp - d_model), (0, dp - d_model)))
    bp = jnp.pad(b_o, (0, dp - d_model)).reshape(1, dp)
    rp = jnp.pad(residual_f32, ((0, n_pad - n), (0, dp - d_model)))
    gp = jnp.pad(gamma, (0, dp - d_model)).reshape(1, dp)
    bep = jnp.pad(beta, (0, dp - d_model)).reshape(1, dp)

    kern = functools.partial(proj_addnorm_kernel, eps=eps, d_valid=d_model)
    out = pl.pallas_call(
        kern,
        out_shape=jax.ShapeDtypeStruct((n_pad, dp), jnp.bfloat16),
        grid_spec=pltpu.PrefetchScalarGridSpec(
            num_scalar_prefetch=0,
            grid=(n_pad // tm, kp // tk),
            in_specs=[
                pl.BlockSpec((tm, tk), lambda i, k: (i, k)),   # attention values (bf16)
                pl.BlockSpec((tk, dp), lambda i, k: (k, 0)),   # W_o^T contraction panel
                pl.BlockSpec((1, dp), lambda i, k: (0, 0)),    # b_o
                pl.BlockSpec((tm, dp), lambda i, k: (i, 0)),   # residual = layer input (f32)
                pl.BlockSpec((1, dp), lambda i, k: (0, 0)),    # gamma1
                pl.BlockSpec((1, dp), lambda i, k: (0, 0)),    # beta1
            ],
            out_specs=pl.BlockSpec((tm, dp), lambda i, k: (i, 0)),
            scratch_shapes=[pltpu.VMEM((tm, dp), jnp.float32)],
        ),
        compiler_params=pltpu.CompilerParams(
            dimension_semantics=("parallel", "arbitrary"),
            vmem_limit_bytes=vmem_limit,
        ),
    )(vp, wp, bp, rp, gp, bep)
    return out[:n, :d_model]                       # bf16: FFN matmul operand + norm2 residual


# ----------------------------------------------------------------------------- FFN + norm2
def ffn_addnorm_kernel(x_ref, w1_ref, b1_ref, w2_ref, b2_ref, g_ref, be_ref, o_ref, acc_ref,
                       *, eps, d_valid):
    """Row-tile x hidden-chunk step of x @ W1^T -> ReLU -> @ W2^T with an f32 accumulator;
    the finalize step fuses + b2 + residual(x) + LayerNorm (dropout == identity)."""
    k = pl.program_id(1)

    @pl.when(k == 0)
    def _():
        acc_ref[...] = jnp.zeros_like(acc_ref)

    h = jnp.dot(x_ref[...], w1_ref[...], preferred_element_type=jnp.float32) + b1_ref[...]
    h = jnp.maximum(h, 0.0)                                    # ReLU (f32)
    acc_ref[...] += jnp.dot(h.astype(jnp.bfloat16), w2_ref[...],
                            preferred_element_type=jnp.float32)

    @pl.when(k == pl.num_programs(1) - 1)
    def _():
        s = acc_ref[...] + b2_ref[...] + x_ref[...].astype(jnp.float32)   # residual = h1
        y = _layernorm_block(s, g_ref[...], be_ref[...], eps=eps, d_valid=d_valid)
        o_ref[...] = y.astype(o_ref.dtype)


def ffn_addnorm(h1_bf16, w1_t, b1, w2_t, b2, gamma, beta,
                *, eps, tile_m, tile_h, vmem_limit, out_dtype):
    n, d_model = h1_bf16.shape
    hidden = w1_t.shape[1]
    dp = _round_up(d_model, 128)
    th = min(tile_h, _round_up(hidden, 128))
    hp = _round_up(_round_up(hidden, 128), th)
    tm = _row_tile(n, tile_m)
    n_pad = _round_up(n, tm)

    xp = jnp.pad(h1_bf16, ((0, n_pad - n), (0, dp - d_model)))
    w1p = jnp.pad(w1_t, ((0, dp - d_model), (0, hp - hidden)))
    b1p = jnp.pad(b1, (0, hp - hidden)).reshape(1, hp)
    w2p = jnp.pad(w2_t, ((0, hp - hidden), (0, dp - d_model)))
    b2p = jnp.pad(b2, (0, dp - d_model)).reshape(1, dp)
    gp = jnp.pad(gamma, (0, dp - d_model)).reshape(1, dp)
    bep = jnp.pad(beta, (0, dp - d_model)).reshape(1, dp)

    row_tiles = n_pad // tm
    cost = pl.CostEstimate(
        flops=4 * n_pad * dp * hp,
        transcendentals=0,
        bytes_accessed=(
            xp.size * xp.dtype.itemsize                          # activations (read once)
            + row_tiles * (w1p.size * w1p.dtype.itemsize         # weights re-streamed per row tile
                           + b1p.size * b1p.dtype.itemsize
                           + w2p.size * w2p.dtype.itemsize
                           + b2p.size * b2p.dtype.itemsize
                           + gp.size * gp.dtype.itemsize
                           + bep.size * bep.dtype.itemsize)
            + n_pad * dp * jnp.dtype(out_dtype).itemsize),
    )

    kern = functools.partial(ffn_addnorm_kernel, eps=eps, d_valid=d_model)
    out = pl.pallas_call(
        kern,
        out_shape=jax.ShapeDtypeStruct((n_pad, dp), out_dtype),
        grid_spec=pltpu.PrefetchScalarGridSpec(
            num_scalar_prefetch=0,
            grid=(n_pad // tm, hp // th),                        # (rows, hidden-chunks)
            in_specs=[
                pl.BlockSpec((tm, dp), lambda i, k: (i, 0)),     # h1 row tile (bf16), also residual
                pl.BlockSpec((dp, th), lambda i, k: (0, k)),     # W1^T hidden-column panel
                pl.BlockSpec((1, th), lambda i, k: (0, k)),      # b1 chunk
                pl.BlockSpec((th, dp), lambda i, k: (k, 0)),     # W2^T hidden-row panel
                pl.BlockSpec((1, dp), lambda i, k: (0, 0)),      # b2
                pl.BlockSpec((1, dp), lambda i, k: (0, 0)),      # gamma2
                pl.BlockSpec((1, dp), lambda i, k: (0, 0)),      # beta2
            ],
            out_specs=pl.BlockSpec((tm, dp), lambda i, k: (i, 0)),
            scratch_shapes=[pltpu.VMEM((tm, dp), jnp.float32)],  # f32 accumulator
        ),
        compiler_params=pltpu.CompilerParams(
            dimension_semantics=("parallel", "arbitrary"),
            vmem_limit_bytes=vmem_limit,
        ),
        cost_estimate=cost,
    )(xp, w1p, b1p, w2p, b2p, gp, bep)
    return out[:n, :d_model]


# ----------------------------------------------------------------------------- encoder layer
@functools.partial(jax.jit,
                   static_argnames=("num_heads", "eps", "tile_m", "tile_h", "tile_k", "tile_n"))
def encoder_layer(x, params, *, num_heads, eps=1e-5,
                  tile_m=None, tile_h=None, tile_k=None, tile_n=None):
    hw = _hw_defaults()
    tile_m = tile_m or hw["tile_m"]
    tile_h = tile_h or hw["tile_h"]
    tile_k = tile_k or hw["tile_k"]
    tile_n = tile_n or hw["tile_n"]
    vmem_limit = hw["vmem_limit"]

    batch, seq, d_model = x.shape
    assert d_model % num_heads == 0
    head_dim = d_model // num_heads
    x2d = x.reshape(batch * seq, d_model)
    xb = x2d.astype(jnp.bfloat16)                   # cast once in the wrapper (halves DMA)

    # ---- Multi-head self-attention (mask=None, as in EncoderLayer.forward) ----
    qkv = qkv_linear(xb, params["w_qkv_t"], params["b_qkv"],
                     tile_m=tile_m, tile_n=tile_n, vmem_limit=vmem_limit)      # (N, 3D) bf16
    qkv = jnp.transpose(qkv.reshape(batch, seq, num_heads, 3 * head_dim), (0, 2, 1, 3))
    q, k, v = jnp.split(qkv, 3, axis=-1)                                       # (B, H, S, Dh)
    q = q.reshape(batch * num_heads, seq, head_dim)
    k = k.reshape(batch * num_heads, seq, head_dim)
    v = v.reshape(batch * num_heads, seq, head_dim)
    values = scaled_dot_product_attention(q, k, v, vmem_limit=vmem_limit)      # (B*H,S,Dh) bf16
    # Faithful to the PyTorch code: (B,H,S,Dh) reshaped straight to (B,S,H*Dh) (no permute-back).
    values = values.reshape(batch * seq, d_model)

    # dropout1: identity (eval) ; norm1(attn_out + x) fused into the projection kernel.
    h1 = attn_out_proj_addnorm(values, params["w_o_t"], params["b_o"], x2d,
                               params["gamma1"], params["beta1"],
                               eps=eps, tile_m=tile_m, tile_k=tile_k,
                               vmem_limit=vmem_limit)                          # (N, D) bf16

    # dropout2: identity (eval) ; norm2(ffn_out + h1) fused into the FFN kernel.
    out2d = ffn_addnorm(h1, params["w1_t"], params["b1"], params["w2_t"], params["b2"],
                        params["gamma2"], params["beta2"],
                        eps=eps, tile_m=tile_m, tile_h=tile_h,
                        vmem_limit=vmem_limit, out_dtype=x.dtype)
    return out2d.reshape(batch, seq, d_model)


# ----------------------------------------------------------------------------- pure-JAX reference
def _layernorm_ref(x, gamma, beta, eps):
    mean = x.mean(axis=-1, keepdims=True)
    var = ((x - mean) ** 2).mean(axis=-1, keepdims=True)
    return gamma * ((x - mean) / jnp.sqrt(var + eps)) + beta


def _ref_encoder_layer(x, params, *, num_heads, eps):
    f32 = lambda a: a.astype(jnp.float32)
    batch, seq, d_model = x.shape
    head_dim = d_model // num_heads
    x2d = x.reshape(batch * seq, d_model)

    qkv = x2d @ f32(params["w_qkv_t"]) + params["b_qkv"]
    qkv = jnp.transpose(qkv.reshape(batch, seq, num_heads, 3 * head_dim), (0, 2, 1, 3))
    q, k, v = jnp.split(qkv, 3, axis=-1)
    s = jnp.einsum("bhqd,bhkd->bhqk", q, k) / (head_dim ** 0.5)
    a = jax.nn.softmax(s, axis=-1)
    vals = jnp.einsum("bhqk,bhkd->bhqd", a, v)
    vals = vals.reshape(batch, seq, num_heads * head_dim).reshape(batch * seq, d_model)
    attn_out = vals @ f32(params["w_o_t"]) + params["b_o"]
    h1 = _layernorm_ref(attn_out + x2d, params["gamma1"], params["beta1"], eps)
    h = jnp.maximum(h1 @ f32(params["w1_t"]) + params["b1"], 0.0)
    ffn_out = h @ f32(params["w2_t"]) + params["b2"]
    out = _layernorm_ref(ffn_out + h1, params["gamma2"], params["beta2"], eps)
    return out.reshape(batch, seq, d_model)


# ----------------------------------------------------------------------------- demo / self-test
if __name__ == "__main__":
    # Small but lane-dense shapes: d_model and ffn_hidden are multiples of 128.
    batch, seq, d_model, num_heads, ffn_hidden = 2, 8, 128, 4, 256
    eps = 1e-5

    key = jax.random.PRNGKey(0)
    keys = jax.random.split(key, 13)
    x = jax.random.normal(keys[0], (batch, seq, d_model), dtype=jnp.float32)

    def _linear_init(kw, kb, out_f, in_f):
        bound = 1.0 / (in_f ** 0.5)
        w = jax.random.uniform(kw, (out_f, in_f), minval=-bound, maxval=bound, dtype=jnp.float32)
        b = jax.random.uniform(kb, (out_f,), minval=-bound, maxval=bound, dtype=jnp.float32)
        return w, b

    w_qkv, b_qkv = _linear_init(keys[1], keys[2], 3 * d_model, d_model)
    w_o, b_o = _linear_init(keys[3], keys[4], d_model, d_model)
    w1, b1 = _linear_init(keys[5], keys[6], ffn_hidden, d_model)
    w2, b2 = _linear_init(keys[7], keys[8], d_model, ffn_hidden)

    # Kernels consume transposed weights (x @ W^T == nn.Linear), cast to bf16.
    params = dict(
        w_qkv_t=w_qkv.T.astype(jnp.bfloat16), b_qkv=b_qkv,
        w_o_t=w_o.T.astype(jnp.bfloat16), b_o=b_o,
        w1_t=w1.T.astype(jnp.bfloat16), b1=b1,
        w2_t=w2.T.astype(jnp.bfloat16), b2=b2,
        gamma1=1.0 + 0.1 * jax.random.normal(keys[9], (d_model,), dtype=jnp.float32),
        beta1=0.1 * jax.random.normal(keys[10], (d_model,), dtype=jnp.float32),
        gamma2=1.0 + 0.1 * jax.random.normal(keys[11], (d_model,), dtype=jnp.float32),
        beta2=0.1 * jax.random.normal(keys[12], (d_model,), dtype=jnp.float32),
    )

    # tile_h=128 exercises the hidden-chunk accumulator + fused-norm finalize path
    # (256 // 128 = 2 reduction steps); other tiles use the generation-aware defaults.
    out = encoder_layer(x, params, num_heads=num_heads, eps=eps, tile_h=128)
    out = jax.block_until_ready(out)

    ref = _ref_encoder_layer(x, params, num_heads=num_heads, eps=eps)
    assert out.shape == (batch, seq, d_model)
    # Tolerance loosened for bf16 weights/activations on the MXU vs the f32 reference.
    assert jnp.allclose(out, ref, atol=5e-2, rtol=5e-2), "mismatch vs pure-JAX reference"

    print("KERNEL_OK")
</pallas_src>

<mosaic_0001>
module attributes {stable_mosaic.version = 11 : i64} {
  func.func @qkv_kernel(%arg0: i32, %arg1: i32, %arg2: memref<16x128xbf16, #tpu.memory_space<vmem>>, %arg3: memref<128x384xbf16, #tpu.memory_space<vmem>>, %arg4: memref<1x384xf32, #tpu.memory_space<vmem>>, %arg5: memref<16x384xbf16, #tpu.memory_space<vmem>>) attributes {dimension_semantics = [#tpu.dimension_semantics<parallel>, #tpu.dimension_semantics<parallel>], iteration_bounds = array<i64: 1, 1>, scalar_prefetch = 0 : i64, scratch_operands = 0 : i64, tpu.core_type = #tpu.core_type<tc>, window_params = [{transform_indices = @transform_0, window_bounds = array<i64: 16, 128>}, {transform_indices = @transform_1, window_bounds = array<i64: 128, 384>}, {transform_indices = @transform_2, window_bounds = array<i64: 1, 384>}, {transform_indices = @transform_3, window_bounds = array<i64: 16, 384>}]} {
    %c0 = arith.constant 0 : index
    %c0_0 = arith.constant 0 : index
    %0 = vector.load %arg2[%c0, %c0_0] : memref<16x128xbf16, #tpu.memory_space<vmem>>, vector<16x128xbf16>
    %c0_1 = arith.constant 0 : index
    %c0_2 = arith.constant 0 : index
    %1 = vector.load %arg3[%c0_1, %c0_2] : memref<128x384xbf16, #tpu.memory_space<vmem>>, vector<128x384xbf16>
    %cst = arith.constant dense<0.000000e+00> : vector<16x384xf32>
    %2 = tpu.matmul %0, %1, %cst {dimension_numbers = #tpu.dot_dimension_numbers<[1], [0], [0], [1], [0, 0, 1, 1], [], []>} : vector<16x128xbf16>, vector<128x384xbf16>, vector<16x384xf32> -> vector<16x384xf32>
    %c0_3 = arith.constant 0 : index
    %c0_4 = arith.constant 0 : index
    %3 = vector.load %arg4[%c0_3, %c0_4] : memref<1x384xf32, #tpu.memory_space<vmem>>, vector<1x384xf32>
    %4 = vector.broadcast %3 : vector<1x384xf32> to vector<16x384xf32>
    %5 = arith.addf %2, %4 : vector<16x384xf32>
    %6 = arith.truncf %5 : vector<16x384xf32> to vector<16x384xbf16>
    %c0_5 = arith.constant 0 : index
    %c0_6 = arith.constant 0 : index
    %7 = vector.load %arg5[%c0_5, %c0_6] : memref<16x384xbf16, #tpu.memory_space<vmem>>, vector<16x384xbf16>
    tpu.vector_store %arg5[%c0_5, %c0_6], %6 {strides = array<i32>} : memref<16x384xbf16, #tpu.memory_space<vmem>>, vector<16x384xbf16>,
    return
  }
  func.func @transform_0(%arg0: i32, %arg1: i32) -> (i32, i32) {
    %c0_i32 = arith.constant 0 : i32
    %c0_i32_0 = arith.constant 0 : i32
    return %arg0, %c0_i32 : i32, i32
  }
  func.func @transform_1(%arg0: i32, %arg1: i32) -> (i32, i32) {
    %c0_i32 = arith.constant 0 : i32
    %c0_i32_0 = arith.constant 0 : i32
    return %c0_i32, %arg1 : i32, i32
  }
  func.func @transform_2(%arg0: i32, %arg1: i32) -> (i32, i32) {
    %c0_i32 = arith.constant 0 : i32
    %c0_i32_0 = arith.constant 0 : i32
    return %c0_i32, %arg1 : i32, i32
  }
  func.func @transform_3(%arg0: i32, %arg1: i32) -> (i32, i32) {
    %c0_i32 = arith.constant 0 : i32
    return %arg0, %arg1 : i32, i32
  }
}

module attributes {stable_mosaic.version = 11 : i64} {
  func.func @attention_kernel(%arg0: i32, %arg1: memref<8x8x32xbf16, #tpu.memory_space<vmem>>, %arg2: memref<8x8x32xbf16, #tpu.memory_space<vmem>>, %arg3: memref<8x8x32xbf16, #tpu.memory_space<vmem>>, %arg4: memref<8x8x32xbf16, #tpu.memory_space<vmem>>) attributes {dimension_semantics = [#tpu.dimension_semantics<parallel>], iteration_bounds = array<i64: 1>, scalar_prefetch = 0 : i64, scratch_operands = 0 : i64, tpu.core_type = #tpu.core_type<tc>, window_params = [{transform_indices = @transform_0, window_bounds = array<i64: 8, 8, 32>}, {transform_indices = @transform_1, window_bounds = array<i64: 8, 8, 32>}, {transform_indices = @transform_2, window_bounds = array<i64: 8, 8, 32>}, {transform_indices = @transform_3, window_bounds = array<i64: 8, 8, 32>}]} {
    %c0 = arith.constant 0 : index
    %c0_0 = arith.constant 0 : index
    %c0_1 = arith.constant 0 : index
    %0 = vector.load %arg1[%c0, %c0_0, %c0_1] : memref<8x8x32xbf16, #tpu.memory_space<vmem>>, vector<8x8x32xbf16>
    %c0_2 = arith.constant 0 : index
    %c0_3 = arith.constant 0 : index
    %c0_4 = arith.constant 0 : index
    %1 = vector.load %arg2[%c0_2, %c0_3, %c0_4] : memref<8x8x32xbf16, #tpu.memory_space<vmem>>, vector<8x8x32xbf16>
    %c0_5 = arith.constant 0 : index
    %c0_6 = arith.constant 0 : index
    %c0_7 = arith.constant 0 : index
    %2 = vector.load %arg3[%c0_5, %c0_6, %c0_7] : memref<8x8x32xbf16, #tpu.memory_space<vmem>>, vector<8x8x32xbf16>
    "tpu.trace_start"() <{level = 10 : i32, message = "bqd,bkd->bqk"}> : () -> ()
    %cst = arith.constant dense<0.000000e+00> : vector<8x8x8xf32>
    %3 = tpu.matmul %0, %1, %cst {dimension_numbers = #tpu.dot_dimension_numbers<[2], [2], [1], [1], [0, 0, 0, 1, 1, 1], [0], [0]>} : vector<8x8x32xbf16>, vector<8x8x32xbf16>, vector<8x8x8xf32> -> vector<8x8x8xf32>
    "tpu.trace_stop"() : () -> ()
    %cst_8 = arith.constant 0.176776692 : f32
    %4 = vector.broadcast %cst_8 : f32 to vector<8x8x8xf32>
    %5 = arith.mulf %3, %4 : vector<8x8x8xf32>
    %cst_9 = arith.constant dense<0xFF800000> : vector<8x8xf32>
    %6 = vector.multi_reduction <maximumf>, %5, %cst_9 [2] : vector<8x8x8xf32> to vector<8x8xf32>
    %7 = vector.shape_cast %6 : vector<8x8xf32> to vector<8x8x1xf32>
    %8 = vector.broadcast %7 : vector<8x8x1xf32> to vector<8x8x8xf32>
    %9 = arith.subf %5, %8 : vector<8x8x8xf32>
    %10 = math.exp %9 : vector<8x8x8xf32>
    %cst_10 = arith.constant dense<0.000000e+00> : vector<8x8xf32>
    %11 = vector.multi_reduction <add>, %10, %cst_10 [2] : vector<8x8x8xf32> to vector<8x8xf32>
    %12 = vector.shape_cast %11 : vector<8x8xf32> to vector<8x8x1xf32>
    %13 = tpu.reciprocal %12 {approx = true} : vector<8x8x1xf32> -> vector<8x8x1xf32>
    %14 = vector.broadcast %13 : vector<8x8x1xf32> to vector<8x8x8xf32>
    %15 = arith.mulf %10, %14 : vector<8x8x8xf32>
    %16 = arith.truncf %15 : vector<8x8x8xf32> to vector<8x8x8xbf16>
    "tpu.trace_start"() <{level = 10 : i32, message = "bqk,bkd->bqd"}> : () -> ()
    %cst_11 = arith.constant dense<0.000000e+00> : vector<8x8x32xf32>
    %17 = tpu.matmul %16, %2, %cst_11 {dimension_numbers = #tpu.dot_dimension_numbers<[2], [1], [1], [2], [0, 0, 0, 1, 1, 2], [0], [0]>} : vector<8x8x8xbf16>, vector<8x8x32xbf16>, vector<8x8x32xf32> -> vector<8x8x32xf32>
    "tpu.trace_stop"() : () -> ()
    %18 = arith.truncf %17 : vector<8x8x32xf32> to vector<8x8x32xbf16>
    %c0_12 = arith.constant 0 : index
    %c0_13 = arith.constant 0 : index
    %c0_14 = arith.constant 0 : index
    %19 = vector.load %arg4[%c0_12, %c0_13, %c0_14] : memref<8x8x32xbf16, #tpu.memory_space<vmem>>, vector<8x8x32xbf16>
    tpu.vector_store %arg4[%c0_12, %c0_13, %c0_14], %18 {strides = array<i32>} : memref<8x8x32xbf16, #tpu.memory_space<vmem>>, vector<8x8x32xbf16>,
    return
  }
  func.func @transform_0(%arg0: i32) -> (i32, i32, i32) {
    %c0_i32 = arith.constant 0 : i32
    %c0_i32_0 = arith.constant 0 : i32
    %c0_i32_1 = arith.constant 0 : i32
    return %arg0, %c0_i32, %c0_i32_0 : i32, i32, i32
  }
  func.func @transform_1(%arg0: i32) -> (i32, i32, i32) {
    %c0_i32 = arith.constant 0 : i32
    %c0_i32_0 = arith.constant 0 : i32
    %c0_i32_1 = arith.constant 0 : i32
    return %arg0, %c0_i32, %c0_i32_0 : i32, i32, i32
  }
  func.func @transform_2(%arg0: i32) -> (i32, i32, i32) {
    %c0_i32 = arith.constant 0 : i32
    %c0_i32_0 = arith.constant 0 : i32
    %c0_i32_1 = arith.constant 0 : i32
    return %arg0, %c0_i32, %c0_i32_0 : i32, i32, i32
  }
  func.func @transform_3(%arg0: i32) -> (i32, i32, i32) {
    %c0_i32 = arith.constant 0 : i32
    %c0_i32_0 = arith.constant 0 : i32
    %c0_i32_1 = arith.constant 0 : i32
    return %arg0, %c0_i32, %c0_i32_0 : i32, i32, i32
  }
}

module attributes {stable_mosaic.version = 11 : i64} {
  func.func @ffn_addnorm_kernel(%arg0: i32, %arg1: i32, %arg2: memref<16x128xbf16, #tpu.memory_space<vmem>>, %arg3: memref<128x128xbf16, #tpu.memory_space<vmem>>, %arg4: memref<1x128xf32, #tpu.memory_space<vmem>>, %arg5: memref<128x128xbf16, #tpu.memory_space<vmem>>, %arg6: memref<1x128xf32, #tpu.memory_space<vmem>>, %arg7: memref<1x128xf32, #tpu.memory_space<vmem>>, %arg8: memref<1x128xf32, #tpu.memory_space<vmem>>, %arg9: memref<16x128xf32, #tpu.memory_space<vmem>>, %arg10: memref<16x128xf32, #tpu.memory_space<vmem>>) attributes {dimension_semantics = [#tpu.dimension_semantics<parallel>, #tpu.dimension_semantics<arbitrary>], iteration_bounds = array<i64: 1, 2>, scalar_prefetch = 0 : i64, scratch_operands = 1 : i64, tpu.core_type = #tpu.core_type<tc>, window_params = [{transform_indices = @transform_0, window_bounds = array<i64: 16, 128>}, {transform_indices = @transform_1, window_bounds = array<i64: 128, 128>}, {transform_indices = @transform_2, window_bounds = array<i64: 1, 128>}, {transform_indices = @transform_3, window_bounds = array<i64: 128, 128>}, {pipeline_mode = #tpu.pipeline_mode<synchronous>, transform_indices = @transform_4, window_bounds = array<i64: 1, 128>}, {pipeline_mode = #tpu.pipeline_mode<synchronous>, transform_indices = @transform_5, window_bounds = array<i64: 1, 128>}, {pipeline_mode = #tpu.pipeline_mode<synchronous>, transform_indices = @transform_6, window_bounds = array<i64: 1, 128>}, {transform_indices = @transform_7, window_bounds = array<i64: 16, 128>}]} {
    %c0_i32 = arith.constant 0 : i32
    %0 = arith.cmpi eq, %arg1, %c0_i32 : i32
    %1 = arith.extui %0 : i1 to i32
    %c0_i32_0 = arith.constant 0 : i32
    %2 = arith.cmpi ne, %1, %c0_i32_0 : i32
    scf.if %2 {
      %cst_15 = arith.constant 0.000000e+00 : f32
      %20 = vector.broadcast %cst_15 : f32 to vector<16x128xf32>
      %c0_16 = arith.constant 0 : index
      %c0_17 = arith.constant 0 : index
      %21 = vector.load %arg10[%c0_16, %c0_17] : memref<16x128xf32, #tpu.memory_space<vmem>>, vector<16x128xf32>
      tpu.vector_store %arg10[%c0_16, %c0_17], %20 {strides = array<i32>} : memref<16x128xf32, #tpu.memory_space<vmem>>, vector<16x128xf32>,
    } else {
    }
    %c0 = arith.constant 0 : index
    %c0_1 = arith.constant 0 : index
    %3 = vector.load %arg2[%c0, %c0_1] : memref<16x128xbf16, #tpu.memory_space<vmem>>, vector<16x128xbf16>
    %c0_2 = arith.constant 0 : index
    %c0_3 = arith.constant 0 : index
    %4 = vector.load %arg3[%c0_2, %c0_3] : memref<128x128xbf16, #tpu.memory_space<vmem>>, vector<128x128xbf16>
    %cst = arith.constant dense<0.000000e+00> : vector<16x128xf32>
    %5 = tpu.matmul %3, %4, %cst {dimension_numbers = #tpu.dot_dimension_numbers<[1], [0], [0], [1], [0, 0, 1, 1], [], []>} : vector<16x128xbf16>, vector<128x128xbf16>, vector<16x128xf32> -> vector<16x128xf32>
    %c0_4 = arith.constant 0 : index
    %c0_5 = arith.constant 0 : index
    %6 = vector.load %arg4[%c0_4, %c0_5] : memref<1x128xf32, #tpu.memory_space<vmem>>, vector<1x128xf32>
    %7 = vector.broadcast %6 : vector<1x128xf32> to vector<16x128xf32>
    %8 = arith.addf %5, %7 : vector<16x128xf32>
    %cst_6 = arith.constant 0.000000e+00 : f32
    %9 = vector.broadcast %cst_6 : f32 to vector<16x128xf32>
    %10 = arith.maximumf %8, %9 : vector<16x128xf32>
    %c0_7 = arith.constant 0 : index
    %c0_8 = arith.constant 0 : index
    %11 = vector.load %arg10[%c0_7, %c0_8] : memref<16x128xf32, #tpu.memory_space<vmem>>, vector<16x128xf32>
    %12 = arith.truncf %10 : vector<16x128xf32> to vector<16x128xbf16>
    %c0_9 = arith.constant 0 : index
    %c0_10 = arith.constant 0 : index
    %13 = vector.load %arg5[%c0_9, %c0_10] : memref<128x128xbf16, #tpu.memory_space<vmem>>, vector<128x128xbf16>
    %cst_11 = arith.constant dense<0.000000e+00> : vector<16x128xf32>
    %14 = tpu.matmul %12, %13, %cst_11 {dimension_numbers = #tpu.dot_dimension_numbers<[1], [0], [0], [1], [0, 0, 1, 1], [], []>} : vector<16x128xbf16>, vector<128x128xbf16>, vector<16x128xf32> -> vector<16x128xf32>
    %15 = arith.addf %11, %14 : vector<16x128xf32>
    %c0_12 = arith.constant 0 : index
    %c0_13 = arith.constant 0 : index
    %16 = vector.load %arg10[%c0_12, %c0_13] : memref<16x128xf32, #tpu.memory_space<vmem>>, vector<16x128xf32>
    tpu.vector_store %arg10[%c0_12, %c0_13], %15 {strides = array<i32>} : memref<16x128xf32, #tpu.memory_space<vmem>>, vector<16x128xf32>,
    %c1_i32 = arith.constant 1 : i32
    %17 = arith.cmpi eq, %arg1, %c1_i32 : i32
    %18 = arith.extui %17 : i1 to i32
    %c0_i32_14 = arith.constant 0 : i32
    %19 = arith.cmpi ne, %18, %c0_i32_14 : i32
    scf.if %19 {
      %c0_15 = arith.constant 0 : index
      %c0_16 = arith.constant 0 : index
      %20 = vector.load %arg10[%c0_15, %c0_16] : memref<16x128xf32, #tpu.memory_space<vmem>>, vector<16x128xf32>
      %c0_17 = arith.constant 0 : index
      %c0_18 = arith.constant 0 : index
      %21 = vector.load %arg6[%c0_17, %c0_18] : memref<1x128xf32, #tpu.memory_space<vmem>>, vector<1x128xf32>
      %22 = vector.broadcast %21 : vector<1x128xf32> to vector<16x128xf32>
      %23 = arith.addf %20, %22 : vector<16x128xf32>
      %c0_19 = arith.constant 0 : index
      %c0_20 = arith.constant 0 : index
      %24 = vector.load %arg2[%c0_19, %c0_20] : memref<16x128xbf16, #tpu.memory_space<vmem>>, vector<16x128xbf16>
      %25 = arith.extf %24 : vector<16x128xbf16> to vector<16x128xf32>
      %26 = arith.addf %23, %25 : vector<16x128xf32>
      %c0_21 = arith.constant 0 : index
      %c0_22 = arith.constant 0 : index
      %27 = vector.load %arg7[%c0_21, %c0_22] : memref<1x128xf32, #tpu.memory_space<vmem>>, vector<1x128xf32>
      %c0_23 = arith.constant 0 : index
      %c0_24 = arith.constant 0 : index
      %28 = vector.load %arg8[%c0_23, %c0_24] : memref<1x128xf32, #tpu.memory_space<vmem>>, vector<1x128xf32>
      %cst_25 = arith.constant dense<0.000000e+00> : vector<16xf32>
      %29 = vector.multi_reduction <add>, %26, %cst_25 [1] : vector<16x128xf32> to vector<16xf32>
      %30 = vector.shape_cast %29 : vector<16xf32> to vector<16x1xf32>
      %cst_26 = arith.constant 1.280000e+02 : f32
      %31 = vector.broadcast %cst_26 : f32 to vector<16x1xf32>
      %32 = arith.divf %30, %31 : vector<16x1xf32>
      %33 = vector.broadcast %32 : vector<16x1xf32> to vector<16x128xf32>
      %34 = arith.subf %26, %33 : vector<16x128xf32>
      %35 = arith.mulf %34, %34 : vector<16x128xf32>
      %cst_27 = arith.constant dense<0.000000e+00> : vector<16xf32>
      %36 = vector.multi_reduction <add>, %35, %cst_27 [1] : vector<16x128xf32> to vector<16xf32>
      %37 = vector.shape_cast %36 : vector<16xf32> to vector<16x1xf32>
      %cst_28 = arith.constant 1.280000e+02 : f32
      %38 = vector.broadcast %cst_28 : f32 to vector<16x1xf32>
      %39 = arith.divf %37, %38 : vector<16x1xf32>
      %cst_29 = arith.constant 9.99999974E-6 : f32
      %40 = vector.broadcast %cst_29 : f32 to vector<16x1xf32>
      %41 = arith.addf %39, %40 : vector<16x1xf32>
      %42 = math.rsqrt %41 : vector<16x1xf32>
      %43 = vector.broadcast %42 : vector<16x1xf32> to vector<16x128xf32>
      %44 = arith.mulf %34, %43 : vector<16x128xf32>
      %45 = vector.broadcast %27 : vector<1x128xf32> to vector<16x128xf32>
      %46 = arith.mulf %45, %44 : vector<16x128xf32>
      %47 = vector.broadcast %28 : vector<1x128xf32> to vector<16x128xf32>
      %48 = arith.addf %46, %47 : vector<16x128xf32>
      %c0_30 = arith.constant 0 : index
      %c0_31 = arith.constant 0 : index
      %49 = vector.load %arg9[%c0_30, %c0_31] : memref<16x128xf32, #tpu.memory_space<vmem>>, vector<16x128xf32>
      tpu.vector_store %arg9[%c0_30, %c0_31], %48 {strides = array<i32>} : memref<16x128xf32, #tpu.memory_space<vmem>>, vector<16x128xf32>,
    } else {
    }
    return
  }
  func.func @transform_0(%arg0: i32, %arg1: i32) -> (i32, i32) {
    %c0_i32 = arith.constant 0 : i32
    %c0_i32_0 = arith.constant 0 : i32
    return %arg0, %c0_i32 : i32, i32
  }
  func.func @transform_1(%arg0: i32, %arg1: i32) -> (i32, i32) {
    %c0_i32 = arith.constant 0 : i32
    %c0_i32_0 = arith.constant 0 : i32
    return %c0_i32, %arg1 : i32, i32
  }
  func.func @transform_2(%arg0: i32, %arg1: i32) -> (i32, i32) {
    %c0_i32 = arith.constant 0 : i32
    %c0_i32_0 = arith.constant 0 : i32
    return %c0_i32, %arg1 : i32, i32
  }
  func.func @transform_3(%arg0: i32, %arg1: i32) -> (i32, i32) {
    %c0_i32 = arith.constant 0 : i32
    %c0_i32_0 = arith.constant 0 : i32
    return %arg1, %c0_i32 : i32, i32
  }
  func.func @transform_4(%arg0: i32, %arg1: i32) -> (i32, i32) {
    %c0_i32 = arith.constant 0 : i32
    %c0_i32_0 = arith.constant 0 : i32
    %c0_i32_1 = arith.constant 0 : i32
    return %c0_i32, %c0_i32_0 : i32, i32
  }
  func.func @transform_5(%arg0: i32, %arg1: i32) -> (i32, i32) {
    %c0_i32 = arith.constant 0 : i32
    %c0_i32_0 = arith.constant 0 : i32
    %c0_i32_1 = arith.constant 0 : i32
    return %c0_i32, %c0_i32_0 : i32, i32
  }
  func.func @transform_6(%arg0: i32, %arg1: i32) -> (i32, i32) {
    %c0_i32 = arith.constant 0 : i32
    %c0_i32_0 = arith.constant 0 : i32
    %c0_i32_1 = arith.constant 0 : i32
    return %c0_i32, %c0_i32_0 : i32, i32
  }
  func.func @transform_7(%arg0: i32, %arg1: i32) -> (i32, i32) {
    %c0_i32 = arith.constant 0 : i32
    %c0_i32_0 = arith.constant 0 : i32
    return %arg0, %c0_i32 : i32, i32
  }
}

module attributes {stable_mosaic.version = 11 : i64} {
  func.func @proj_addnorm_kernel(%arg0: i32, %arg1: i32, %arg2: memref<16x128xbf16, #tpu.memory_space<vmem>>, %arg3: memref<128x128xbf16, #tpu.memory_space<vmem>>, %arg4: memref<1x128xf32, #tpu.memory_space<vmem>>, %arg5: memref<16x128xf32, #tpu.memory_space<vmem>>, %arg6: memref<1x128xf32, #tpu.memory_space<vmem>>, %arg7: memref<1x128xf32, #tpu.memory_space<vmem>>, %arg8: memref<16x128xbf16, #tpu.memory_space<vmem>>, %arg9: memref<16x128xf32, #tpu.memory_space<vmem>>) attributes {dimension_semantics = [#tpu.dimension_semantics<parallel>, #tpu.dimension_semantics<arbitrary>], iteration_bounds = array<i64: 1, 1>, scalar_prefetch = 0 : i64, scratch_operands = 1 : i64, tpu.core_type = #tpu.core_type<tc>, window_params = [{transform_indices = @transform_0, window_bounds = array<i64: 16, 128>}, {transform_indices = @transform_1, window_bounds = array<i64: 128, 128>}, {pipeline_mode = #tpu.pipeline_mode<synchronous>, transform_indices = @transform_2, window_bounds = array<i64: 1, 128>}, {transform_indices = @transform_3, window_bounds = array<i64: 16, 128>}, {pipeline_mode = #tpu.pipeline_mode<synchronous>, transform_indices = @transform_4, window_bounds = array<i64: 1, 128>}, {pipeline_mode = #tpu.pipeline_mode<synchronous>, transform_indices = @transform_5, window_bounds = array<i64: 1, 128>}, {transform_indices = @transform_6, window_bounds = array<i64: 16, 128>}]} {
    %c0_i32 = arith.constant 0 : i32
    %0 = arith.cmpi eq, %arg1, %c0_i32 : i32
    %1 = arith.extui %0 : i1 to i32
    %c0_i32_0 = arith.constant 0 : i32
    %2 = arith.cmpi ne, %1, %c0_i32_0 : i32
    scf.if %2 {
      %cst_10 = arith.constant 0.000000e+00 : f32
      %12 = vector.broadcast %cst_10 : f32 to vector<16x128xf32>
      %c0_11 = arith.constant 0 : index
      %c0_12 = arith.constant 0 : index
      %13 = vector.load %arg9[%c0_11, %c0_12] : memref<16x128xf32, #tpu.memory_space<vmem>>, vector<16x128xf32>
      tpu.vector_store %arg9[%c0_11, %c0_12], %12 {strides = array<i32>} : memref<16x128xf32, #tpu.memory_space<vmem>>, vector<16x128xf32>,
    } else {
    }
    %c0 = arith.constant 0 : index
    %c0_1 = arith.constant 0 : index
    %3 = vector.load %arg9[%c0, %c0_1] : memref<16x128xf32, #tpu.memory_space<vmem>>, vector<16x128xf32>
    %c0_2 = arith.constant 0 : index
    %c0_3 = arith.constant 0 : index
    %4 = vector.load %arg2[%c0_2, %c0_3] : memref<16x128xbf16, #tpu.memory_space<vmem>>, vector<16x128xbf16>
    %c0_4 = arith.constant 0 : index
    %c0_5 = arith.constant 0 : index
    %5 = vector.load %arg3[%c0_4, %c0_5] : memref<128x128xbf16, #tpu.memory_space<vmem>>, vector<128x128xbf16>
    %cst = arith.constant dense<0.000000e+00> : vector<16x128xf32>
    %6 = tpu.matmul %4, %5, %cst {dimension_numbers = #tpu.dot_dimension_numbers<[1], [0], [0], [1], [0, 0, 1, 1], [], []>} : vector<16x128xbf16>, vector<128x128xbf16>, vector<16x128xf32> -> vector<16x128xf32>
    %7 = arith.addf %3, %6 : vector<16x128xf32>
    %c0_6 = arith.constant 0 : index
    %c0_7 = arith.constant 0 : index
    %8 = vector.load %arg9[%c0_6, %c0_7] : memref<16x128xf32, #tpu.memory_space<vmem>>, vector<16x128xf32>
    tpu.vector_store %arg9[%c0_6, %c0_7], %7 {strides = array<i32>} : memref<16x128xf32, #tpu.memory_space<vmem>>, vector<16x128xf32>,
    %c0_i32_8 = arith.constant 0 : i32
    %9 = arith.cmpi eq, %arg1, %c0_i32_8 : i32
    %10 = arith.extui %9 : i1 to i32
    %c0_i32_9 = arith.constant 0 : i32
    %11 = arith.cmpi ne, %10, %c0_i32_9 : i32
    scf.if %11 {
      %c0_10 = arith.constant 0 : index
      %c0_11 = arith.constant 0 : index
      %12 = vector.load %arg9[%c0_10, %c0_11] : memref<16x128xf32, #tpu.memory_space<vmem>>, vector<16x128xf32>
      %c0_12 = arith.constant 0 : index
      %c0_13 = arith.constant 0 : index
      %13 = vector.load %arg4[%c0_12, %c0_13] : memref<1x128xf32, #tpu.memory_space<vmem>>, vector<1x128xf32>
      %14 = vector.broadcast %13 : vector<1x128xf32> to vector<16x128xf32>
      %15 = arith.addf %12, %14 : vector<16x128xf32>
      %c0_14 = arith.constant 0 : index
      %c0_15 = arith.constant 0 : index
      %16 = vector.load %arg5[%c0_14, %c0_15] : memref<16x128xf32, #tpu.memory_space<vmem>>, vector<16x128xf32>
      %17 = arith.addf %15, %16 : vector<16x128xf32>
      %c0_16 = arith.constant 0 : index
      %c0_17 = arith.constant 0 : index
      %18 = vector.load %arg6[%c0_16, %c0_17] : memref<1x128xf32, #tpu.memory_space<vmem>>, vector<1x128xf32>
      %c0_18 = arith.constant 0 : index
      %c0_19 = arith.constant 0 : index
      %19 = vector.load %arg7[%c0_18, %c0_19] : memref<1x128xf32, #tpu.memory_space<vmem>>, vector<1x128xf32>
      %cst_20 = arith.constant dense<0.000000e+00> : vector<16xf32>
      %20 = vector.multi_reduction <add>, %17, %cst_20 [1] : vector<16x128xf32> to vector<16xf32>
      %21 = vector.shape_cast %20 : vector<16xf32> to vector<16x1xf32>
      %cst_21 = arith.constant 1.280000e+02 : f32
      %22 = vector.broadcast %cst_21 : f32 to vector<16x1xf32>
      %23 = arith.divf %21, %22 : vector<16x1xf32>
      %24 = vector.broadcast %23 : vector<16x1xf32> to vector<16x128xf32>
      %25 = arith.subf %17, %24 : vector<16x128xf32>
      %26 = arith.mulf %25, %25 : vector<16x128xf32>
      %cst_22 = arith.constant dense<0.000000e+00> : vector<16xf32>
      %27 = vector.multi_reduction <add>, %26, %cst_22 [1] : vector<16x128xf32> to vector<16xf32>
      %28 = vector.shape_cast %27 : vector<16xf32> to vector<16x1xf32>
      %cst_23 = arith.constant 1.280000e+02 : f32
      %29 = vector.broadcast %cst_23 : f32 to vector<16x1xf32>
      %30 = arith.divf %28, %29 : vector<16x1xf32>
      %cst_24 = arith.constant 9.99999974E-6 : f32
      %31 = vector.broadcast %cst_24 : f32 to vector<16x1xf32>
      %32 = arith.addf %30, %31 : vector<16x1xf32>
      %33 = math.rsqrt %32 : vector<16x1xf32>
      %34 = vector.broadcast %33 : vector<16x1xf32> to vector<16x128xf32>
      %35 = arith.mulf %25, %34 : vector<16x128xf32>
      %36 = vector.broadcast %18 : vector<1x128xf32> to vector<16x128xf32>
      %37 = arith.mulf %36, %35 : vector<16x128xf32>
      %38 = vector.broadcast %19 : vector<1x128xf32> to vector<16x128xf32>
      %39 = arith.addf %37, %38 : vector<16x128xf32>
      %40 = arith.truncf %39 : vector<16x128xf32> to vector<16x128xbf16>
      %c0_25 = arith.constant 0 : index
      %c0_26 = arith.constant 0 : index
      %41 = vector.load %arg8[%c0_25, %c0_26] : memref<16x128xbf16, #tpu.memory_space<vmem>>, vector<16x128xbf16>
      tpu.vector_store %arg8[%c0_25, %c0_26], %40 {strides = array<i32>} : memref<16x128xbf16, #tpu.memory_space<vmem>>, vector<16x128xbf16>,
    } else {
    }
    return
  }
  func.func @transform_0(%arg0: i32, %arg1: i32) -> (i32, i32) {
    %c0_i32 = arith.constant 0 : i32
    return %arg0, %arg1 : i32, i32
  }
  func.func @transform_1(%arg0: i32, %arg1: i32) -> (i32, i32) {
    %c0_i32 = arith.constant 0 : i32
    %c0_i32_0 = arith.constant 0 : i32
    return %arg1, %c0_i32 : i32, i32
  }
  func.func @transform_2(%arg0: i32, %arg1: i32) -> (i32, i32) {
    %c0_i32 = arith.constant 0 : i32
    %c0_i32_0 = arith.constant 0 : i32
    %c0_i32_1 = arith.constant 0 : i32
    return %c0_i32, %c0_i32_0 : i32, i32
  }
  func.func @transform_3(%arg0: i32, %arg1: i32) -> (i32, i32) {
    %c0_i32 = arith.constant 0 : i32
    %c0_i32_0 = arith.constant 0 : i32
    return %arg0, %c0_i32 : i32, i32
  }
  func.func @transform_4(%arg0: i32, %arg1: i32) -> (i32, i32) {
    %c0_i32 = arith.constant 0 : i32
    %c0_i32_0 = arith.constant 0 : i32
    %c0_i32_1 = arith.constant 0 : i32
    return %c0_i32, %c0_i32_0 : i32, i32
  }
  func.func @transform_5(%arg0: i32, %arg1: i32) -> (i32, i32) {
    %c0_i32 = arith.constant 0 : i32
    %c0_i32_0 = arith.constant 0 : i32
    %c0_i32_1 = arith.constant 0 : i32
    return %c0_i32, %c0_i32_0 : i32, i32
  }
  func.func @transform_6(%arg0: i32, %arg1: i32) -> (i32, i32) {
    %c0_i32 = arith.constant 0 : i32
    %c0_i32_0 = arith.constant 0 : i32
    return %arg0, %c0_i32 : i32, i32
  }
}

</mosaic_0001>

<llo_original>
// kernel: encoder_layer.4
$region0: #{encoder_layer.4}
  #allocation0 [shape = 'u32[]', space=smem, size = 0x4, offset = 0x4, fixed_abs, tag = 'smem constant byte address 0x4 - core index']
  #allocation1 [shape = 'u32[72,128]{1,0:T(1,128)}', space=vmem, size = 0x9000, scoped, tag = 'internal scratch']
  %s0 = inlined_call_operand.vmem [shape: bf16[16,128], index: 0, kind: input, shape index: {}]
  %s1 = inlined_call_operand.hbm [shape: bf16[128,384], index: 1, kind: input, shape index: {}]
  %s2 = inlined_call_operand.vmem [shape: f32[1,384], index: 2, kind: input, shape index: {}]
  %s3 = inlined_call_operand.vmem [shape: bf16[16,384], index: 3, kind: output, shape index: {}]
  %s4 = sld [smem:[#allocation0]]
  $region26: #{encoder_layer.4} parent=0
    _
  %s6 = ssub.s32 1, %s4
  %s7 = scalar_select 0, %s6, %s4
  $region1: #{encoder_layer.4} parent=0
    #allocation2 [shape = 'u8[98304]{0}', space=vmem, size = 0x18000, scoped, tag = 'input window, operand 1, single buffered']
    #allocation3 [shape = 's32[1]{0}', space=sflag, size = 0x4, scoped, tag = 'scoped memory for encoder_layer.4']
    %8 = vsyncpa [#allocation3], 0
    // Predicated region
    $region2: #{encoder_layer.4} parent=1 // pred_check
      _
    $region3: #{encoder_layer.4} parent=1 // pred_check_branch
      %10 = sbr.rel (0) target = $region5
    $region4: #{encoder_layer.4} parent=1 // pred_region
      _
    $region5: #{encoder_layer.4} parent=1 // pred_fallthru
      _
    // Predicated region
    $region6: #{encoder_layer.4} parent=1 // pred_check
      _
    $region7: #{encoder_layer.4} parent=1 // pred_check_branch
      %12 = sbr.rel (0) target = $region9
    $region8: #{encoder_layer.4} parent=1 // pred_region
      %14 = vsyncadd [#allocation3], 0
      %s15 = sshll.u32 %s1, 4
      %s16 = int_to_ptr.hbm [resolvable:$true] %s15
      %s17 = sshll.u32 [#allocation2], 4
      %s18 = int_to_ptr.vmem [resolvable:$true] %s17
      %23 = dma.hbm_to_vmem [thread:$0]  %s16, 3072, %s18, [#allocation3], 192, 192, 12
    $region9: #{encoder_layer.4} parent=1 // pred_fallthru
      _
    // Predicated region
    $region10: #{encoder_layer.4} parent=1 // pred_check
      _
    $region11: #{encoder_layer.4} parent=1 // pred_check_branch
      %25 = sbr.rel (0) target = $region13
    $region12: #{encoder_layer.4} parent=1 // pred_region
      _
    $region13: #{encoder_layer.4} parent=1 // pred_fallthru
      _
    // Predicated region
    $region14: #{encoder_layer.4} parent=1 // pred_check
      _
    $region15: #{encoder_layer.4} parent=1 // pred_check_branch
      %27 = sbr.rel (0) target = $region17
    $region16: #{encoder_layer.4} parent=1 // pred_region
      %29 = dma.done [#allocation3], 3072
    $region17: #{encoder_layer.4} parent=1 // pred_fallthru
      _
    %v30 = vld [vmem:[%s0] sm:$0xf]
    %v31 = vld [vmem:[%s0 + $0x4] sm:$0xf]
    %v32 = vld [vmem:[#allocation2] sm:$0xff]
    %v33 = vld [vmem:[#allocation2 + $0x8] sm:$0xf]
    %v34 = vld [vmem:[#allocation2 + $0xc] sm:$0xff]
    %v35 = vld [vmem:[#allocation2 + $0x14] sm:$0xf]
    %v36 = vld [vmem:[#allocation2 + $0x18] sm:$0xff]
    %v37 = vld [vmem:[#allocation2 + $0x20] sm:$0xf]
    %v38 = vld [vmem:[#allocation2 + $0x24] sm:$0xff]
    %v39 = vld [vmem:[#allocation2 + $0x2c] sm:$0xf]
    %v40 = vld [vmem:[#allocation2 + $0x30] sm:$0xff]
    %v41 = vld [vmem:[#allocation2 + $0x38] sm:$0xf]
    %v42 = vld [vmem:[#allocation2 + $0x3c] sm:$0xff]
    %v43 = vld [vmem:[#allocation2 + $0x44] sm:$0xf]
    %v44 = vld [vmem:[#allocation2 + $0x48] sm:$0xff]
    %v45 = vld [vmem:[#allocation2 + $0x50] sm:$0xf]
    %v46 = vld [vmem:[#allocation2 + $0x54] sm:$0xff]
    %v47 = vld [vmem:[#allocation2 + $0x5c] sm:$0xf]
    %v48 = vld [vmem:[#allocation2 + $0x60] sm:$0xff]
    %v49 = vld [vmem:[#allocation2 + $0x68] sm:$0xf]
    %v50 = vld [vmem:[#allocation2 + $0x6c] sm:$0xff]
    %v51 = vld [vmem:[#allocation2 + $0x74] sm:$0xf]
    %v52 = vld [vmem:[#allocation2 + $0x78] sm:$0xff]
    %v53 = vld [vmem:[#allocation2 + $0x80] sm:$0xf]
    %v54 = vld [vmem:[#allocation2 + $0x84] sm:$0xff]
    %v55 = vld [vmem:[#allocation2 + $0x8c] sm:$0xf]
    %v56 = vld [vmem:[#allocation2 + $0x90] sm:$0xff]
    %v57 = vld [vmem:[#allocation2 + $0x98] sm:$0xf]
    %v58 = vld [vmem:[#allocation2 + $0x9c] sm:$0xff]
    %v59 = vld [vmem:[#allocation2 + $0xa4] sm:$0xf]
    %v60 = vld [vmem:[#allocation2 + $0xa8] sm:$0xff]
    %v61 = vld [vmem:[#allocation2 + $0xb0] sm:$0xf]
    %v62 = vld [vmem:[#allocation2 + $0xb4] sm:$0xff]
    %v63 = vld [vmem:[#allocation2 + $0xbc] sm:$0xf]
    %v64 = vld [vmem:[%s2] sm:$0x7]
    %v66 = vperm.slane %v64, 0
    %v67 = vperm.slane %v64, 1
    %v68 = vperm.slane %v64, 2
    %v74 = vunpack.c.l.b16 %v30
    %v75 = vunpack.c.l.b16 %v31
    %v76 = vpack.c.b16 %v75, %v74
    %v110 = vunpack.c.l.b16 %v32
    %v111 = vunpack.c.h.b16 %v32
    %v112 = vunpack.c.l.b16 %v33
    %v113 = vunpack.c.l.b16 %v34
    %v114 = vunpack.c.h.b16 %v34
    %v115 = vunpack.c.l.b16 %v35
    %v116 = vunpack.c.l.b16 %v36
    %v117 = vunpack.c.h.b16 %v36
    %v118 = vunpack.c.l.b16 %v37
    %v119 = vunpack.c.l.b16 %v38
    %v120 = vunpack.c.h.b16 %v38
    %v121 = vunpack.c.l.b16 %v39
    %v122 = vunpack.c.l.b16 %v40
    %v123 = vunpack.c.h.b16 %v40
    %v124 = vunpack.c.l.b16 %v41
    %v125 = vunpack.c.l.b16 %v42
    %v126 = vunpack.c.h.b16 %v42
    %v127 = vunpack.c.l.b16 %v43
    %v128 = vunpack.c.l.b16 %v44
    %v129 = vunpack.c.h.b16 %v44
    %v130 = vunpack.c.l.b16 %v45
    %v131 = vunpack.c.l.b16 %v46
    %v132 = vunpack.c.h.b16 %v46
    %v133 = vunpack.c.l.b16 %v47
    %v134 = vunpack.c.l.b16 %v48
    %v135 = vunpack.c.h.b16 %v48
    %v136 = vunpack.c.l.b16 %v49
    %v137 = vunpack.c.l.b16 %v50
    %v138 = vunpack.c.h.b16 %v50
    %v139 = vunpack.c.l.b16 %v51
    %v140 = vunpack.c.l.b16 %v52
    %v141 = vunpack.c.h.b16 %v52
    %v142 = vunpack.c.l.b16 %v53
    %v143 = vunpack.c.l.b16 %v54
    %v144 = vunpack.c.h.b16 %v54
    %v145 = vunpack.c.l.b16 %v55
    %v146 = vunpack.c.l.b16 %v56
    %v147 = vunpack.c.h.b16 %v56
    %v148 = vunpack.c.l.b16 %v57
    %v149 = vunpack.c.l.b16 %v58
    %v150 = vunpack.c.h.b16 %v58
    %v151 = vunpack.c.l.b16 %v59
    %v152 = vunpack.c.l.b16 %v60
    %v153 = vunpack.c.h.b16 %v60
    %v154 = vunpack.c.l.b16 %v61
    %v155 = vunpack.c.l.b16 %v62
    %v156 = vunpack.c.h.b16 %v62
    %v157 = vunpack.c.l.b16 %v63
    %v158 = vpack.c.b16 %v113, %v110
    %v159 = vpack.c.b16 %v114, %v111
    %v160 = vpack.c.b16 %v115, %v112
    %v161 = vpack.c.b16 %v119, %v116
    %v162 = vpack.c.b16 %v120, %v117
    %v163 = vpack.c.b16 %v121, %v118
    %v164 = vpack.c.b16 %v125, %v122
    %v165 = vpack.c.b16 %v126, %v123
    %v166 = vpack.c.b16 %v127, %v124
    %v167 = vpack.c.b16 %v131, %v128
    %v168 = vpack.c.b16 %v132, %v129
    %v169 = vpack.c.b16 %v133, %v130
    %v170 = vpack.c.b16 %v137, %v134
    %v171 = vpack.c.b16 %v138, %v135
    %v172 = vpack.c.b16 %v139, %v136
    %v173 = vpack.c.b16 %v143, %v140
    %v174 = vpack.c.b16 %v144, %v141
    %v175 = vpack.c.b16 %v145, %v142
    %v176 = vpack.c.b16 %v149, %v146
    %v177 = vpack.c.b16 %v150, %v147
    %v178 = vpack.c.b16 %v151, %v148
    %v179 = vpack.c.b16 %v155, %v152
    %v180 = vpack.c.b16 %v156, %v153
    %v181 = vpack.c.b16 %v157, %v154
    %206 = vmatpush.bf16.msra.mxu0 %v179
    %207 = vmatpush.bf16.msra.mxu0 %v176
    %208 = vmatpush.bf16.msra.mxu0 %v173
    %209 = vmatpush.bf16.msra.mxu0 %v170
    %210 = vmatpush.bf16.msra.mxu0 %v167
    %211 = vmatpush.bf16.msra.mxu0 %v164
    %212 = vmatpush.bf16.msra.mxu0 %v161
    %213 = vmatpush.bf16.msra.mxu0 %v158
    %214 = vmatmul.bf16.gmra.mxu0 %v76
    %v215 = vpop.f32.mrf.mxu0
    %v216 = vadd.f32 %v66, %v215
    %v217 = vpop.f32.mrf.mxu0
    %v218 = vadd.f32 %v66, %v217
    %219 = vdwg.mxu0
    %220 = vmatpush.bf16.msra.mxu0 %v180
    %221 = vmatpush.bf16.msra.mxu0 %v177
    %222 = vmatpush.bf16.msra.mxu0 %v174
    %223 = vmatpush.bf16.msra.mxu0 %v171
    %224 = vmatpush.bf16.msra.mxu0 %v168
    %225 = vmatpush.bf16.msra.mxu0 %v165
    %226 = vmatpush.bf16.msra.mxu0 %v162
    %227 = vmatpush.bf16.msra.mxu0 %v159
    %228 = vmatmul.bf16.gmra.mxu0 %v76
    %v229 = vpop.f32.mrf.mxu0
    %v230 = vadd.f32 %v67, %v229
    %v231 = vpop.f32.mrf.mxu0
    %v232 = vadd.f32 %v67, %v231
    %233 = vdwg.mxu0
    %234 = vmatpush.bf16.msra.mxu0 %v181
    %235 = vmatpush.bf16.msra.mxu0 %v178
    %236 = vmatpush.bf16.msra.mxu0 %v175
    %237 = vmatpush.bf16.msra.mxu0 %v172
    %238 = vmatpush.bf16.msra.mxu0 %v169
    %239 = vmatpush.bf16.msra.mxu0 %v166
    %240 = vmatpush.bf16.msra.mxu0 %v163
    %241 = vmatpush.bf16.msra.mxu0 %v160
    %242 = vmatmul.bf16.gmra.mxu0 %v76
    %v243 = vpop.f32.mrf.mxu0
    %v244 = vadd.f32 %v68, %v243
    %v245 = vpop.f32.mrf.mxu0
    %v246 = vadd.f32 %v68, %v245
    %247 = vdwg.mxu0
    %v248 = vpack.c.bf16 %v230, %v216
    %v249 = vpack.c.bf16 %v244, %v244
    %v250 = vpack.c.bf16 %v232, %v218
    %v251 = vpack.c.bf16 %v246, %v246
    %252 = vst [vmem:[%s3] sm:$0xff] %v248
    %253 = vst [vmem:[%s3 + $0x8] sm:$0xf] %v249
    %254 = vst [vmem:[%s3 + $0xc] sm:$0xff] %v250
    %255 = vst [vmem:[%s3 + $0x14] sm:$0xf] %v251
    // Predicated region
    $region18: #{encoder_layer.4} parent=1 // pred_check
      _
    $region19: #{encoder_layer.4} parent=1 // pred_check_branch
      %257 = sbr.rel (0) target = $region21
    $region20: #{encoder_layer.4} parent=1 // pred_region
      _
    $region21: #{encoder_layer.4} parent=1 // pred_fallthru
      _
    // Predicated region
    $region22: #{encoder_layer.4} parent=1 // pred_check
      _
    $region23: #{encoder_layer.4} parent=1 // pred_check_branch
      %259 = sbr.rel (0) target = $region25
    $region24: #{encoder_layer.4} parent=1 // pred_region
      _
    $region25: #{encoder_layer.4} parent=1 // pred_fallthru
      _
    %260 = vsyncpa [#allocation3], 1

// kernel: encoder_layer.6
$region0: #{encoder_layer.6}
  #allocation0 [shape = 'u32[]', space=smem, size = 0x4, offset = 0x4, fixed_abs, tag = 'smem constant byte address 0x4 - core index']
  #allocation1 [shape = 'u32[72,128]{1,0:T(1,128)}', space=vmem, size = 0x9000, scoped, tag = 'internal scratch']
  #allocation2 [shape = 'f32[16,128]{1,0:T(8,128)}', space=vmem, size = 0x2000, scoped, tag = 'scratch operand']
  %s0 = inlined_call_operand.vmem [shape: bf16[16,128], index: 0, kind: input, shape index: {}]
  %s1 = inlined_call_operand.vmem [shape: bf16[128,128], index: 1, kind: input, shape index: {}]
  %s2 = inlined_call_operand.vmem [shape: f32[1,128], index: 2, kind: input, shape index: {}]
  %s3 = inlined_call_operand.vmem [shape: f32[16,128], index: 3, kind: input, shape index: {}]
  %s4 = inlined_call_operand.vmem [shape: f32[1,128], index: 4, kind: input, shape index: {}]
  %s5 = inlined_call_operand.vmem [shape: f32[1,128], index: 5, kind: input, shape index: {}]
  %s6 = inlined_call_operand.vmem [shape: bf16[16,128], index: 6, kind: output, shape index: {}]
  %s7 = sld [smem:[#allocation0]]
  $region42: #{encoder_layer.6} parent=0
    _
  %s9 = ssub.s32 1, %s7
  %s10 = scalar_select 0, %s9, %s7
  // Predicated region
  $region2: #{encoder_layer.6} parent=0 // pred_check
    _
  $region3: #{encoder_layer.6} parent=0 // pred_check_branch
    %12 = sbr.rel (0) target = $region5
  $region4: #{encoder_layer.6} parent=0 // pred_region
    _
  $region5: #{encoder_layer.6} parent=0 // pred_fallthru
    _
  // Predicated region
  $region6: #{encoder_layer.6} parent=0 // pred_check
    _
  $region7: #{encoder_layer.6} parent=0 // pred_check_branch
    %14 = sbr.rel (0) target = $region9
  $region8: #{encoder_layer.6} parent=0 // pred_region
    _
  $region9: #{encoder_layer.6} parent=0 // pred_fallthru
    _
  // Predicated region
  $region10: #{encoder_layer.6} parent=0 // pred_check
    _
  $region11: #{encoder_layer.6} parent=0 // pred_check_branch
    %16 = sbr.rel (0) target = $region13
  $region12: #{encoder_layer.6} parent=0 // pred_region
    _
  $region13: #{encoder_layer.6} parent=0 // pred_fallthru
    _
  // Predicated region
  $region14: #{encoder_layer.6} parent=0 // pred_check
    _
  $region15: #{encoder_layer.6} parent=0 // pred_check_branch
    %18 = sbr.rel (0) target = $region17
  $region16: #{encoder_layer.6} parent=0 // pred_region
    _
  $region17: #{encoder_layer.6} parent=0 // pred_fallthru
    _
  // Predicated region
  $region18: #{encoder_layer.6} parent=0 // pred_check
    _
  $region19: #{encoder_layer.6} parent=0 // pred_check_branch
    %20 = sbr.rel (0) target = $region21
  $region20: #{encoder_layer.6} parent=0 // pred_region
    _
  $region21: #{encoder_layer.6} parent=0 // pred_fallthru
    _
  // Predicated region
  $region22: #{encoder_layer.6} parent=0 // pred_check
    _
  $region23: #{encoder_layer.6} parent=0 // pred_check_branch
    %22 = sbr.rel (0) target = $region25
  $region24: #{encoder_layer.6} parent=0 // pred_region
    _
  $region25: #{encoder_layer.6} parent=0 // pred_fallthru
    _
  %p23 = scmp.eq.s32.totalorder 0, 0
  // Predicated region
  $region26: #{encoder_layer.6} parent=0 // pred_check
    %p24 = pneg %p23
  $region27: #{encoder_layer.6} parent=0 // pred_check_branch
    %26 = sbr.rel (%p24) target = $region29
  $region28: #{encoder_layer.6} parent=0 // pred_region
    %27 = vst [vmem:[#allocation2] sm:$0xff] 0.0
    %28 = vst [vmem:[#allocation2 + $0x8] sm:$0xff] 0.0
  $region29: #{encoder_layer.6} parent=0 // pred_fallthru
    _
  %v29 = vld [vmem:[#allocation2] sm:$0xff]
  %v30 = vld [vmem:[#allocation2 + $0x8] sm:$0xff]
  %v31 = vld [vmem:[%s0] sm:$0xf]
  %v32 = vld [vmem:[%s0 + $0x4] sm:$0xf]
  %v33 = vld [vmem:[%s1] sm:$0xf]
  %v34 = vld [vmem:[%s1 + $0x4] sm:$0xf]
  %v35 = vld [vmem:[%s1 + $0x8] sm:$0xf]
  %v36 = vld [vmem:[%s1 + $0xc] sm:$0xf]
  %v37 = vld [vmem:[%s1 + $0x10] sm:$0xf]
  %v38 = vld [vmem:[%s1 + $0x14] sm:$0xf]
  %v39 = vld [vmem:[%s1 + $0x18] sm:$0xf]
  %v40 = vld [vmem:[%s1 + $0x1c] sm:$0xf]
  %v41 = vld [vmem:[%s1 + $0x20] sm:$0xf]
  %v42 = vld [vmem:[%s1 + $0x24] sm:$0xf]
  %v43 = vld [vmem:[%s1 + $0x28] sm:$0xf]
  %v44 = vld [vmem:[%s1 + $0x2c] sm:$0xf]
  %v45 = vld [vmem:[%s1 + $0x30] sm:$0xf]
  %v46 = vld [vmem:[%s1 + $0x34] sm:$0xf]
  %v47 = vld [vmem:[%s1 + $0x38] sm:$0xf]
  %v48 = vld [vmem:[%s1 + $0x3c] sm:$0xf]
  %v51 = vunpack.c.l.b16 %v31
  %v52 = vunpack.c.l.b16 %v32
  %v53 = vpack.c.b16 %v52, %v51
  %v71 = vunpack.c.l.b16 %v33
  %v72 = vunpack.c.l.b16 %v34
  %v73 = vunpack.c.l.b16 %v35
  %v74 = vunpack.c.l.b16 %v36
  %v75 = vunpack.c.l.b16 %v37
  %v76 = vunpack.c.l.b16 %v38
  %v77 = vunpack.c.l.b16 %v39
  %v78 = vunpack.c.l.b16 %v40
  %v79 = vunpack.c.l.b16 %v41
  %v80 = vunpack.c.l.b16 %v42
  %v81 = vunpack.c.l.b16 %v43
  %v82 = vunpack.c.l.b16 %v44
  %v83 = vunpack.c.l.b16 %v45
  %v84 = vunpack.c.l.b16 %v46
  %v85 = vunpack.c.l.b16 %v47
  %v86 = vunpack.c.l.b16 %v48
  %v87 = vpack.c.b16 %v72, %v71
  %v88 = vpack.c.b16 %v74, %v73
  %v89 = vpack.c.b16 %v76, %v75
  %v90 = vpack.c.b16 %v78, %v77
  %v91 = vpack.c.b16 %v80, %v79
  %v92 = vpack.c.b16 %v82, %v81
  %v93 = vpack.c.b16 %v84, %v83
  %v94 = vpack.c.b16 %v86, %v85
  %103 = vmatpush.bf16.msra.mxu0 %v94
  %104 = vmatpush.bf16.msra.mxu0 %v93
  %105 = vmatpush.bf16.msra.mxu0 %v92
  %106 = vmatpush.bf16.msra.mxu0 %v91
  %107 = vmatpush.bf16.msra.mxu0 %v90
  %108 = vmatpush.bf16.msra.mxu0 %v89
  %109 = vmatpush.bf16.msra.mxu0 %v88
  %110 = vmatpush.bf16.msra.mxu0 %v87
  %111 = vmatmul.bf16.gmra.mxu0 %v53
  %v112 = vpop.f32.mrf.mxu0
  %v113 = vadd.f32 0.0, %v112
  %v114 = vpop.f32.mrf.mxu0
  %v115 = vadd.f32 0.0, %v114
  %116 = vdwg.mxu0
  %v117 = vadd.f32 %v29, %v113
  %v118 = vadd.f32 %v30, %v115
  %119 = vst [vmem:[#allocation2] sm:$0xff] %v117
  %120 = vst [vmem:[#allocation2 + $0x8] sm:$0xff] %v118
  // Predicated region
  $region30: #{encoder_layer.6} parent=0 // pred_check
    %p121 = pneg %p23
  $region31: #{encoder_layer.6} parent=0 // pred_check_branch
    %123 = sbr.rel (%p121) target = $region33
  $region32: #{encoder_layer.6} parent=0 // pred_region
    %v124 = vld [vmem:[#allocation2] sm:$0xff]
    %v125 = vld [vmem:[#allocation2 + $0x8] sm:$0xff]
    %v126 = vld [vmem:[%s2] sm:$0x1]
    %v128 = vperm.slane %v126, 0
    %v130 = vadd.f32 %v124, %v128
    %v131 = vadd.f32 %v125, %v128
    %v132 = vld [vmem:[%s3] sm:$0xff]
    %v133 = vld [vmem:[%s3 + $0x8] sm:$0xff]
    %v134 = vadd.f32 %v130, %v132
    %v135 = vadd.f32 %v131, %v133
    %v136 = vld [vmem:[%s4] sm:$0x1]
    %v137 = vld [vmem:[%s5] sm:$0x1]
    %138 = vadd.xlane.f32.xlu0 %v134
    %v139 = vpop.xlane.xlu0 %138
    %140 = vadd.xlane.f32.xlu0 %v135
    %v141 = vpop.xlane.xlu0 %140
    %v142 = vrcp.pop 128.0
    %v143 = vmul.f32 128.0, %v142
    %v144 = vsub.f32 1.0, %v143
    %v145 = vmul.f32 %v142, %v144
    %v146 = vadd.f32 %v142, %v145
    %vm147 = vweird.f32 %v142
    %v148 = vsel %vm147, %v142, %v146
    %v149 = vmul.f32 %v139, %v148
    %v150 = vmul.f32 %v141, %v148
    %v151 = vsub.f32 %v134, %v149
    %v152 = vsub.f32 %v135, %v150
    %v153 = vmul.f32 %v151, %v151
    %v154 = vmul.f32 %v152, %v152
    %155 = vadd.xlane.f32.xlu0 %v153
    %v156 = vpop.xlane.xlu0 %155
    %157 = vadd.xlane.f32.xlu0 %v154
    %v158 = vpop.xlane.xlu0 %157
    %v159 = vmul.f32 %v156, %v148
    %v160 = vmul.f32 %v158, %v148
    %v161 = vadd.f32 %v159, 1e-05
    %v162 = vadd.f32 %v160, 1e-05
    %v163 = vrsqrt.pop %v161
    %v164 = vmul.f32 %v163, %v161
    %v165 = vmul.f32 %v164, %v163
    %v166 = vmul.f32 0.5, %v165
    %v167 = vsub.f32 1.5, %v166
    %v168 = vmul.f32 %v163, %v167
    %vm169 = vweird.f32 %v161
    %vm170 = vweird.f32 %v163
    %vm171 = vmor %vm169, %vm170
    %v172 = vsel %vm171, %v163, %v168
    %v173 = vrsqrt.pop %v162
    %v174 = vmul.f32 %v173, %v162
    %v175 = vmul.f32 %v174, %v173
    %v176 = vmul.f32 0.5, %v175
    %v177 = vsub.f32 1.5, %v176
    %v178 = vmul.f32 %v173, %v177
    %vm179 = vweird.f32 %v162
    %vm180 = vweird.f32 %v173
    %vm181 = vmor %vm179, %vm180
    %v182 = vsel %vm181, %v173, %v178
    %v183 = vmul.f32 %v151, %v172
    %v184 = vmul.f32 %v152, %v182
    %v186 = vperm.slane %v136, 0
    %v188 = vmul.f32 %v186, %v183
    %v189 = vmul.f32 %v186, %v184
    %v191 = vperm.slane %v137, 0
    %v193 = vadd.f32 %v188, %v191
    %v194 = vadd.f32 %v189, %v191
    %v195 = vpack.c.bf16 %v193, %v193
    %v196 = vpack.c.bf16 %v194, %v194
    %197 = vst [vmem:[%s6] sm:$0xf] %v195
    %198 = vst [vmem:[%s6 + $0x4] sm:$0xf] %v196
  $region33: #{encoder_layer.6} parent=0 // pred_fallthru
    _
  // Predicated region
  $region34: #{encoder_layer.6} parent=0 // pred_check
    _
  $region35: #{encoder_layer.6} parent=0 // pred_check_branch
    %200 = sbr.rel (0) target = $region37
  $region36: #{encoder_layer.6} parent=0 // pred_region
    _
  $region37: #{encoder_layer.6} parent=0 // pred_fallthru
    _
  // Predicated region
  $region38: #{encoder_layer.6} parent=0 // pred_check
    _
  $region39: #{encoder_layer.6} parent=0 // pred_check_branch
    %202 = sbr.rel (0) target = $region41
  $region40: #{encoder_layer.6} parent=0 // pred_region
    _
  $region41: #{encoder_layer.6} parent=0 // pred_fallthru
    _

// kernel: encoder_layer.5
$region0: #{encoder_layer.5}
  #allocation0 [shape = 'u32[]', space=smem, size = 0x4, offset = 0x4, fixed_abs, tag = 'smem constant byte address 0x4 - core index']
  #allocation1 [shape = 'u32[72,128]{1,0:T(1,128)}', space=vmem, size = 0x9000, scoped, tag = 'internal scratch']
  %s0 = inlined_call_operand.vmem [shape: bf16[8,8,32], index: 0, kind: input, shape index: {}]
  %s1 = inlined_call_operand.vmem [shape: bf16[8,8,32], index: 1, kind: input, shape index: {}]
  %s2 = inlined_call_operand.vmem [shape: bf16[8,8,32], index: 2, kind: input, shape index: {}]
  %s3 = inlined_call_operand.vmem [shape: bf16[8,8,32], index: 3, kind: output, shape index: {}]
  %s4 = sld [smem:[#allocation0]]
  $region22: #{encoder_layer.5} parent=0
    _
  %s6 = ssub.s32 1, %s4
  %s7 = scalar_select 0, %s6, %s4
  // Predicated region
  $region2: #{encoder_layer.5} parent=0 // pred_check
    _
  $region3: #{encoder_layer.5} parent=0 // pred_check_branch
    %9 = sbr.rel (0) target = $region5
  $region4: #{encoder_layer.5} parent=0 // pred_region
    _
  $region5: #{encoder_layer.5} parent=0 // pred_fallthru
    _
  // Predicated region
  $region6: #{encoder_layer.5} parent=0 // pred_check
    _
  $region7: #{encoder_layer.5} parent=0 // pred_check_branch
    %11 = sbr.rel (0) target = $region9
  $region8: #{encoder_layer.5} parent=0 // pred_region
    _
  $region9: #{encoder_layer.5} parent=0 // pred_fallthru
    _
  // Predicated region
  $region10: #{encoder_layer.5} parent=0 // pred_check
    _
  $region11: #{encoder_layer.5} parent=0 // pred_check_branch
    %13 = sbr.rel (0) target = $region13
  $region12: #{encoder_layer.5} parent=0 // pred_region
    _
  $region13: #{encoder_layer.5} parent=0 // pred_fallthru
    _
  %v15 = vld [vmem:[%s0] sm:$0xf]
  %v16 = vld [vmem:[%s0 + $0x4] sm:$0xf]
  %v17 = vld [vmem:[%s0 + $0x8] sm:$0xf]
  %v18 = vld [vmem:[%s0 + $0xc] sm:$0xf]
  %v19 = vld [vmem:[%s0 + $0x10] sm:$0xf]
  %v20 = vld [vmem:[%s0 + $0x14] sm:$0xf]
  %v21 = vld [vmem:[%s0 + $0x18] sm:$0xf]
  %v22 = vld [vmem:[%s0 + $0x1c] sm:$0xf]
  %v23 = vld [vmem:[%s1] sm:$0xf]
  %v24 = vld [vmem:[%s1 + $0x4] sm:$0xf]
  %v25 = vld [vmem:[%s1 + $0x8] sm:$0xf]
  %v26 = vld [vmem:[%s1 + $0xc] sm:$0xf]
  %v27 = vld [vmem:[%s1 + $0x10] sm:$0xf]
  %v28 = vld [vmem:[%s1 + $0x14] sm:$0xf]
  %v29 = vld [vmem:[%s1 + $0x18] sm:$0xf]
  %v30 = vld [vmem:[%s1 + $0x1c] sm:$0xf]
  %v31 = vld [vmem:[%s2] sm:$0xf]
  %v32 = vld [vmem:[%s2 + $0x4] sm:$0xf]
  %v33 = vld [vmem:[%s2 + $0x8] sm:$0xf]
  %v34 = vld [vmem:[%s2 + $0xc] sm:$0xf]
  %v35 = vld [vmem:[%s2 + $0x10] sm:$0xf]
  %v36 = vld [vmem:[%s2 + $0x14] sm:$0xf]
  %v37 = vld [vmem:[%s2 + $0x18] sm:$0xf]
  %v38 = vld [vmem:[%s2 + $0x1c] sm:$0xf]
  %vm39 = vcmask 261120
  %v41 = vsel %vm39, %v15, 0
  %v44 = vsel %vm39, %v23, 0
  %46 = vmatpush.bf16.xpose.msra.mxu0 0
  %47 = vmatpush.bf16.xpose.msra.mxu0 0
  %48 = vmatpush.bf16.xpose.msra.mxu0 0
  %49 = vmatpush.bf16.xpose.msra.mxu0 0
  %50 = vmatpush.bf16.xpose.msra.mxu0 0
  %51 = vmatpush.bf16.xpose.msra.mxu0 0
  %52 = vmatpush.bf16.xpose.msra.mxu0 0
  %53 = vmatpush.bf16.xpose.msra.mxu0 %v44
  %54 = vmatmul.bf16.gmra.mxu0 %v41
  %v55 = vpop.f32.mrf.mxu0
  %v56 = vadd.f32 0.0, %v55
  %v57 = vpop.f32.mrf.mxu0
  %58 = vdwg.mxu0
  %v60 = vsel %vm39, %v16, 0
  %v63 = vsel %vm39, %v24, 0
  %65 = vmatpush.bf16.xpose.msra.mxu0 0
  %66 = vmatpush.bf16.xpose.msra.mxu0 0
  %67 = vmatpush.bf16.xpose.msra.mxu0 0
  %68 = vmatpush.bf16.xpose.msra.mxu0 0
  %69 = vmatpush.bf16.xpose.msra.mxu0 0
  %70 = vmatpush.bf16.xpose.msra.mxu0 0
  %71 = vmatpush.bf16.xpose.msra.mxu0 0
  %72 = vmatpush.bf16.xpose.msra.mxu0 %v63
  %73 = vmatmul.bf16.gmra.mxu0 %v60
  %v74 = vpop.f32.mrf.mxu0
  %v75 = vadd.f32 0.0, %v74
  %v76 = vpop.f32.mrf.mxu0
  %77 = vdwg.mxu0
  %v79 = vsel %vm39, %v17, 0
  %v82 = vsel %vm39, %v25, 0
  %84 = vmatpush.bf16.xpose.msra.mxu0 0
  %85 = vmatpush.bf16.xpose.msra.mxu0 0
  %86 = vmatpush.bf16.xpose.msra.mxu0 0
  %87 = vmatpush.bf16.xpose.msra.mxu0 0
  %88 = vmatpush.bf16.xpose.msra.mxu0 0
  %89 = vmatpush.bf16.xpose.msra.mxu0 0
  %90 = vmatpush.bf16.xpose.msra.mxu0 0
  %91 = vmatpush.bf16.xpose.msra.mxu0 %v82
  %92 = vmatmul.bf16.gmra.mxu0 %v79
  %v93 = vpop.f32.mrf.mxu0
  %v94 = vadd.f32 0.0, %v93
  %v95 = vpop.f32.mrf.mxu0
  %96 = vdwg.mxu0
  %v98 = vsel %vm39, %v18, 0
  %v101 = vsel %vm39, %v26, 0
  %103 = vmatpush.bf16.xpose.msra.mxu0 0
  %104 = vmatpush.bf16.xpose.msra.mxu0 0
  %105 = vmatpush.bf16.xpose.msra.mxu0 0
  %106 = vmatpush.bf16.xpose.msra.mxu0 0
  %107 = vmatpush.bf16.xpose.msra.mxu0 0
  %108 = vmatpush.bf16.xpose.msra.mxu0 0
  %109 = vmatpush.bf16.xpose.msra.mxu0 0
  %110 = vmatpush.bf16.xpose.msra.mxu0 %v101
  %111 = vmatmul.bf16.gmra.mxu0 %v98
  %v112 = vpop.f32.mrf.mxu0
  %v113 = vadd.f32 0.0, %v112
  %v114 = vpop.f32.mrf.mxu0
  %115 = vdwg.mxu0
  %v117 = vsel %vm39, %v19, 0
  %v120 = vsel %vm39, %v27, 0
  %122 = vmatpush.bf16.xpose.msra.mxu0 0
  %123 = vmatpush.bf16.xpose.msra.mxu0 0
  %124 = vmatpush.bf16.xpose.msra.mxu0 0
  %125 = vmatpush.bf16.xpose.msra.mxu0 0
  %126 = vmatpush.bf16.xpose.msra.mxu0 0
  %127 = vmatpush.bf16.xpose.msra.mxu0 0
  %128 = vmatpush.bf16.xpose.msra.mxu0 0
  %129 = vmatpush.bf16.xpose.msra.mxu0 %v120
  %130 = vmatmul.bf16.gmra.mxu0 %v117
  %v131 = vpop.f32.mrf.mxu0
  %v132 = vadd.f32 0.0, %v131
  %v133 = vpop.f32.mrf.mxu0
  %134 = vdwg.mxu0
  %v136 = vsel %vm39, %v20, 0
  %v139 = vsel %vm39, %v28, 0
  %141 = vmatpush.bf16.xpose.msra.mxu0 0
  %142 = vmatpush.bf16.xpose.msra.mxu0 0
  %143 = vmatpush.bf16.xpose.msra.mxu0 0
  %144 = vmatpush.bf16.xpose.msra.mxu0 0
  %145 = vmatpush.bf16.xpose.msra.mxu0 0
  %146 = vmatpush.bf16.xpose.msra.mxu0 0
  %147 = vmatpush.bf16.xpose.msra.mxu0 0
  %148 = vmatpush.bf16.xpose.msra.mxu0 %v139
  %149 = vmatmul.bf16.gmra.mxu0 %v136
  %v150 = vpop.f32.mrf.mxu0
  %v151 = vadd.f32 0.0, %v150
  %v152 = vpop.f32.mrf.mxu0
  %153 = vdwg.mxu0
  %v155 = vsel %vm39, %v21, 0
  %v158 = vsel %vm39, %v29, 0
  %160 = vmatpush.bf16.xpose.msra.mxu0 0
  %161 = vmatpush.bf16.xpose.msra.mxu0 0
  %162 = vmatpush.bf16.xpose.msra.mxu0 0
  %163 = vmatpush.bf16.xpose.msra.mxu0 0
  %164 = vmatpush.bf16.xpose.msra.mxu0 0
  %165 = vmatpush.bf16.xpose.msra.mxu0 0
  %166 = vmatpush.bf16.xpose.msra.mxu0 0
  %167 = vmatpush.bf16.xpose.msra.mxu0 %v158
  %168 = vmatmul.bf16.gmra.mxu0 %v155
  %v169 = vpop.f32.mrf.mxu0
  %v170 = vadd.f32 0.0, %v169
  %v171 = vpop.f32.mrf.mxu0
  %172 = vdwg.mxu0
  %v174 = vsel %vm39, %v22, 0
  %v177 = vsel %vm39, %v30, 0
  %179 = vmatpush.bf16.xpose.msra.mxu0 0
  %180 = vmatpush.bf16.xpose.msra.mxu0 0
  %181 = vmatpush.bf16.xpose.msra.mxu0 0
  %182 = vmatpush.bf16.xpose.msra.mxu0 0
  %183 = vmatpush.bf16.xpose.msra.mxu0 0
  %184 = vmatpush.bf16.xpose.msra.mxu0 0
  %185 = vmatpush.bf16.xpose.msra.mxu0 0
  %186 = vmatpush.bf16.xpose.msra.mxu0 %v177
  %187 = vmatmul.bf16.gmra.mxu0 %v174
  %v188 = vpop.f32.mrf.mxu0
  %v189 = vadd.f32 0.0, %v188
  %v190 = vpop.f32.mrf.mxu0
  %191 = vdwg.mxu0
  %v192 = vmul.f32 %v56, 0.17677669
  %v193 = vmul.f32 %v75, 0.17677669
  %v194 = vmul.f32 %v94, 0.17677669
  %v195 = vmul.f32 %v113, 0.17677669
  %v196 = vmul.f32 %v132, 0.17677669
  %v197 = vmul.f32 %v151, 0.17677669
  %v198 = vmul.f32 %v170, 0.17677669
  %v199 = vmul.f32 %v189, 0.17677669
  %vm200 = vcmask 64512
  %v201 = vsel %vm200, %v192, -inf
  %202 = vmax.xlane.f32.xlu0 %v201
  %v203 = vpop.xlane.xlu0 %202
  %v204 = vsel %vm200, %v193, -inf
  %205 = vmax.xlane.f32.xlu0 %v204
  %v206 = vpop.xlane.xlu0 %205
  %v207 = vsel %vm200, %v194, -inf
  %208 = vmax.xlane.f32.xlu0 %v207
  %v209 = vpop.xlane.xlu0 %208
  %v210 = vsel %vm200, %v195, -inf
  %211 = vmax.xlane.f32.xlu0 %v210
  %v212 = vpop.xlane.xlu0 %211
  %v213 = vsel %vm200, %v196, -inf
  %214 = vmax.xlane.f32.xlu0 %v213
  %v215 = vpop.xlane.xlu0 %214
  %v216 = vsel %vm200, %v197, -inf
  %217 = vmax.xlane.f32.xlu0 %v216
  %v218 = vpop.xlane.xlu0 %217
  %v219 = vsel %vm200, %v198, -inf
  %220 = vmax.xlane.f32.xlu0 %v219
  %v221 = vpop.xlane.xlu0 %220
  %v222 = vsel %vm200, %v199, -inf
  %223 = vmax.xlane.f32.xlu0 %v222
  %v224 = vpop.xlane.xlu0 %223
  %v225 = vsub.f32 %v192, %v203
  %v226 = vsub.f32 %v193, %v206
  %v227 = vsub.f32 %v194, %v209
  %v228 = vsub.f32 %v195, %v212
  %v229 = vsub.f32 %v196, %v215
  %v230 = vsub.f32 %v197, %v218
  %v231 = vsub.f32 %v198, %v221
  %v232 = vsub.f32 %v199, %v224
  %v233 = vmul.f32 %v225, 1.442695
  %v234 = vpow.pop %v233
  %v235 = vmul.f32 %v226, 1.442695
  %v236 = vpow.pop %v235
  %v237 = vmul.f32 %v227, 1.442695
  %v238 = vpow.pop %v237
  %v239 = vmul.f32 %v228, 1.442695
  %v240 = vpow.pop %v239
  %v241 = vmul.f32 %v229, 1.442695
  %v242 = vpow.pop %v241
  %v243 = vmul.f32 %v230, 1.442695
  %v244 = vpow.pop %v243
  %v245 = vmul.f32 %v231, 1.442695
  %v246 = vpow.pop %v245
  %v247 = vmul.f32 %v232, 1.442695
  %v248 = vpow.pop %v247
  %v249 = vsel %vm200, %v234, 0.0
  %250 = vadd.xlane.f32.xlu0 %v249
  %v251 = vpop.xlane.xlu0 %250
  %v252 = vsel %vm200, %v236, 0.0
  %253 = vadd.xlane.f32.xlu0 %v252
  %v254 = vpop.xlane.xlu0 %253
  %v255 = vsel %vm200, %v238, 0.0
  %256 = vadd.xlane.f32.xlu0 %v255
  %v257 = vpop.xlane.xlu0 %256
  %v258 = vsel %vm200, %v240, 0.0
  %259 = vadd.xlane.f32.xlu0 %v258
  %v260 = vpop.xlane.xlu0 %259
  %v261 = vsel %vm200, %v242, 0.0
  %262 = vadd.xlane.f32.xlu0 %v261
  %v263 = vpop.xlane.xlu0 %262
  %v264 = vsel %vm200, %v244, 0.0
  %265 = vadd.xlane.f32.xlu0 %v264
  %v266 = vpop.xlane.xlu0 %265
  %v267 = vsel %vm200, %v246, 0.0
  %268 = vadd.xlane.f32.xlu0 %v267
  %v269 = vpop.xlane.xlu0 %268
  %v270 = vsel %vm200, %v248, 0.0
  %271 = vadd.xlane.f32.xlu0 %v270
  %v272 = vpop.xlane.xlu0 %271
  %v273 = vrcp.pop %v251
  %v274 = vrcp.pop %v254
  %v275 = vrcp.pop %v257
  %v276 = vrcp.pop %v260
  %v277 = vrcp.pop %v263
  %v278 = vrcp.pop %v266
  %v279 = vrcp.pop %v269
  %v280 = vrcp.pop %v272
  %v281 = vmul.f32 %v234, %v273
  %v282 = vmul.f32 %v236, %v274
  %v283 = vmul.f32 %v238, %v275
  %v284 = vmul.f32 %v240, %v276
  %v285 = vmul.f32 %v242, %v277
  %v286 = vmul.f32 %v244, %v278
  %v287 = vmul.f32 %v246, %v279
  %v288 = vmul.f32 %v248, %v280
  %v289 = vpack.c.bf16 %v281, %v281
  %v290 = vpack.c.bf16 %v282, %v282
  %v291 = vpack.c.bf16 %v283, %v283
  %v292 = vpack.c.bf16 %v284, %v284
  %v293 = vpack.c.bf16 %v285, %v285
  %v294 = vpack.c.bf16 %v286, %v286
  %v295 = vpack.c.bf16 %v287, %v287
  %v296 = vpack.c.bf16 %v288, %v288
  %v298 = vsel %vm200, %v289, 0
  %vm300 = vcmask 1043456
  %v302 = vsel %vm300, %v31, 0
  %304 = vmatpush.bf16.msra.mxu0 0
  %305 = vmatpush.bf16.msra.mxu0 0
  %306 = vmatpush.bf16.msra.mxu0 0
  %307 = vmatpush.bf16.msra.mxu0 0
  %308 = vmatpush.bf16.msra.mxu0 0
  %309 = vmatpush.bf16.msra.mxu0 0
  %310 = vmatpush.bf16.msra.mxu0 0
  %311 = vmatpush.bf16.msra.mxu0 %v302
  %312 = vmatmul.bf16.gmra.mxu0 %v298
  %v313 = vpop.f32.mrf.mxu0
  %v314 = vadd.f32 0.0, %v313
  %v315 = vpop.f32.mrf.mxu0
  %316 = vdwg.mxu0
  %v318 = vsel %vm200, %v290, 0
  %v321 = vsel %vm300, %v32, 0
  %323 = vmatpush.bf16.msra.mxu0 0
  %324 = vmatpush.bf16.msra.mxu0 0
  %325 = vmatpush.bf16.msra.mxu0 0
  %326 = vmatpush.bf16.msra.mxu0 0
  %327 = vmatpush.bf16.msra.mxu0 0
  %328 = vmatpush.bf16.msra.mxu0 0
  %329 = vmatpush.bf16.msra.mxu0 0
  %330 = vmatpush.bf16.msra.mxu0 %v321
  %331 = vmatmul.bf16.gmra.mxu0 %v318
  %v332 = vpop.f32.mrf.mxu0
  %v333 = vadd.f32 0.0, %v332
  %v334 = vpop.f32.mrf.mxu0
  %335 = vdwg.mxu0
  %v337 = vsel %vm200, %v291, 0
  %v340 = vsel %vm300, %v33, 0
  %342 = vmatpush.bf16.msra.mxu0 0
  %343 = vmatpush.bf16.msra.mxu0 0
  %344 = vmatpush.bf16.msra.mxu0 0
  %345 = vmatpush.bf16.msra.mxu0 0
  %346 = vmatpush.bf16.msra.mxu0 0
  %347 = vmatpush.bf16.msra.mxu0 0
  %348 = vmatpush.bf16.msra.mxu0 0
  %349 = vmatpush.bf16.msra.mxu0 %v340
  %350 = vmatmul.bf16.gmra.mxu0 %v337
  %v351 = vpop.f32.mrf.mxu0
  %v352 = vadd.f32 0.0, %v351
  %v353 = vpop.f32.mrf.mxu0
  %354 = vdwg.mxu0
  %v356 = vsel %vm200, %v292, 0
  %v359 = vsel %vm300, %v34, 0
  %361 = vmatpush.bf16.msra.mxu0 0
  %362 = vmatpush.bf16.msra.mxu0 0
  %363 = vmatpush.bf16.msra.mxu0 0
  %364 = vmatpush.bf16.msra.mxu0 0
  %365 = vmatpush.bf16.msra.mxu0 0
  %366 = vmatpush.bf16.msra.mxu0 0
  %367 = vmatpush.bf16.msra.mxu0 0
  %368 = vmatpush.bf16.msra.mxu0 %v359
  %369 = vmatmul.bf16.gmra.mxu0 %v356
  %v370 = vpop.f32.mrf.mxu0
  %v371 = vadd.f32 0.0, %v370
  %v372 = vpop.f32.mrf.mxu0
  %373 = vdwg.mxu0
  %v375 = vsel %vm200, %v293, 0
  %v378 = vsel %vm300, %v35, 0
  %380 = vmatpush.bf16.msra.mxu0 0
  %381 = vmatpush.bf16.msra.mxu0 0
  %382 = vmatpush.bf16.msra.mxu0 0
  %383 = vmatpush.bf16.msra.mxu0 0
  %384 = vmatpush.bf16.msra.mxu0 0
  %385 = vmatpush.bf16.msra.mxu0 0
  %386 = vmatpush.bf16.msra.mxu0 0
  %387 = vmatpush.bf16.msra.mxu0 %v378
  %388 = vmatmul.bf16.gmra.mxu0 %v375
  %v389 = vpop.f32.mrf.mxu0
  %v390 = vadd.f32 0.0, %v389
  %v391 = vpop.f32.mrf.mxu0
  %392 = vdwg.mxu0
  %v394 = vsel %vm200, %v294, 0
  %v397 = vsel %vm300, %v36, 0
  %399 = vmatpush.bf16.msra.mxu0 0
  %400 = vmatpush.bf16.msra.mxu0 0
  %401 = vmatpush.bf16.msra.mxu0 0
  %402 = vmatpush.bf16.msra.mxu0 0
  %403 = vmatpush.bf16.msra.mxu0 0
  %404 = vmatpush.bf16.msra.mxu0 0
  %405 = vmatpush.bf16.msra.mxu0 0
  %406 = vmatpush.bf16.msra.mxu0 %v397
  %407 = vmatmul.bf16.gmra.mxu0 %v394
  %v408 = vpop.f32.mrf.mxu0
  %v409 = vadd.f32 0.0, %v408
  %v410 = vpop.f32.mrf.mxu0
  %411 = vdwg.mxu0
  %v413 = vsel %vm200, %v295, 0
  %v416 = vsel %vm300, %v37, 0
  %418 = vmatpush.bf16.msra.mxu0 0
  %419 = vmatpush.bf16.msra.mxu0 0
  %420 = vmatpush.bf16.msra.mxu0 0
  %421 = vmatpush.bf16.msra.mxu0 0
  %422 = vmatpush.bf16.msra.mxu0 0
  %423 = vmatpush.bf16.msra.mxu0 0
  %424 = vmatpush.bf16.msra.mxu0 0
  %425 = vmatpush.bf16.msra.mxu0 %v416
  %426 = vmatmul.bf16.gmra.mxu0 %v413
  %v427 = vpop.f32.mrf.mxu0
  %v428 = vadd.f32 0.0, %v427
  %v429 = vpop.f32.mrf.mxu0
  %430 = vdwg.mxu0
  %v432 = vsel %vm200, %v296, 0
  %v435 = vsel %vm300, %v38, 0
  %437 = vmatpush.bf16.msra.mxu0 0
  %438 = vmatpush.bf16.msra.mxu0 0
  %439 = vmatpush.bf16.msra.mxu0 0
  %440 = vmatpush.bf16.msra.mxu0 0
  %441 = vmatpush.bf16.msra.mxu0 0
  %442 = vmatpush.bf16.msra.mxu0 0
  %443 = vmatpush.bf16.msra.mxu0 0
  %444 = vmatpush.bf16.msra.mxu0 %v435
  %445 = vmatmul.bf16.gmra.mxu0 %v432
  %v446 = vpop.f32.mrf.mxu0
  %v447 = vadd.f32 0.0, %v446
  %v448 = vpop.f32.mrf.mxu0
  %449 = vdwg.mxu0
  %v450 = vpack.c.bf16 %v314, %v314
  %v451 = vpack.c.bf16 %v333, %v333
  %v452 = vpack.c.bf16 %v352, %v352
  %v453 = vpack.c.bf16 %v371, %v371
  %v454 = vpack.c.bf16 %v390, %v390
  %v455 = vpack.c.bf16 %v409, %v409
  %v456 = vpack.c.bf16 %v428, %v428
  %v457 = vpack.c.bf16 %v447, %v447
  %vm458 = vcmask 257024
  %459 = vst.msk [vmem:[%s3] sm:$0xf] %vm458, %v450
  %460 = vst.msk [vmem:[%s3 + $0x4] sm:$0xf] %vm458, %v451
  %461 = vst.msk [vmem:[%s3 + $0x8] sm:$0xf] %vm458, %v452
  %462 = vst.msk [vmem:[%s3 + $0xc] sm:$0xf] %vm458, %v453
  %463 = vst.msk [vmem:[%s3 + $0x10] sm:$0xf] %vm458, %v454
  %464 = vst.msk [vmem:[%s3 + $0x14] sm:$0xf] %vm458, %v455
  %465 = vst.msk [vmem:[%s3 + $0x18] sm:$0xf] %vm458, %v456
  %466 = vst.msk [vmem:[%s3 + $0x1c] sm:$0xf] %vm458, %v457
  // Predicated region
  $region14: #{encoder_layer.5} parent=0 // pred_check
    _
  $region15: #{encoder_layer.5} parent=0 // pred_check_branch
    %468 = sbr.rel (0) target = $region17
  $region16: #{encoder_layer.5} parent=0 // pred_region
    _
  $region17: #{encoder_layer.5} parent=0 // pred_fallthru
    _
  // Predicated region
  $region18: #{encoder_layer.5} parent=0 // pred_check
    _
  $region19: #{encoder_layer.5} parent=0 // pred_check_branch
    %470 = sbr.rel (0) target = $region21
  $region20: #{encoder_layer.5} parent=0 // pred_region
    _
  $region21: #{encoder_layer.5} parent=0 // pred_fallthru
    _

// kernel: encoder_layer.7
$region0: #{encoder_layer.7}
  #allocation0 [shape = 'u32[]', space=smem, size = 0x4, offset = 0x4, fixed_abs, tag = 'smem constant byte address 0x4 - core index']
  #allocation1 [shape = 'u32[72,128]{1,0:T(1,128)}', space=vmem, size = 0x9000, scoped, tag = 'internal scratch']
  #allocation2 [shape = 'f32[16,128]{1,0:T(8,128)}', space=vmem, size = 0x2000, scoped, tag = 'scratch operand']
  %s0 = inlined_call_operand.vmem [shape: bf16[16,128], index: 0, kind: input, shape index: {}]
  %s1 = inlined_call_operand.vmem [shape: bf16[128,256], index: 1, kind: input, shape index: {}]
  %s2 = inlined_call_operand.vmem [shape: f32[1,256], index: 2, kind: input, shape index: {}]
  %s3 = inlined_call_operand.vmem [shape: bf16[256,128], index: 3, kind: input, shape index: {}]
  %s4 = inlined_call_operand.vmem [shape: f32[1,128], index: 4, kind: input, shape index: {}]
  %s5 = inlined_call_operand.vmem [shape: f32[1,128], index: 5, kind: input, shape index: {}]
  %s6 = inlined_call_operand.vmem [shape: f32[1,128], index: 6, kind: input, shape index: {}]
  %s7 = inlined_call_operand.hbm [shape: f32[16,128], index: 7, kind: output, shape index: {}]
  %s8 = sld [smem:[#allocation0]]
  $region110: #{encoder_layer.7} parent=0
    _
  %s10 = ssub.s32 1, %s8
  %s11 = scalar_select 0, %s10, %s8
  $region1: #{encoder_layer.7} parent=0
    #allocation3 [shape = 'u8[65536]{0}', space=vmem, size = 0x10000, scoped, tag = 'input window, operand 1']
    #allocation4 [shape = 'u8[8192]{0}', space=vmem, size = 0x2000, scoped, tag = 'output window, operand 0, single buffered']
    #allocation5 [shape = 's32[2]{0}', space=sflag, size = 0x8, scoped, tag = 'scoped memory for encoder_layer.7']
    %12 = vsyncpa [#allocation5], 0
    loop: start=0, step=1, limit=4
    $region2: #{encoder_layer.7} parent=1 // loop_pre_header
      _
    $region3: #{encoder_layer.7} parent=1 // loop_header
      %s14 = sphi 0, %s18
      %p15 = scmp.ge.s32.totalorder %s14, 4
      %s21 = sphi 0, %s33
      %s22 = sphi 0, %s29
      %s23 = sphi 0, %s21
      %s24 = sphi 0, %s22
      %s25 = sphi 0, %s23
      %s26 = sphi 0, %s24
      %s36 = sphi 0, %s38
      %s39 = sphi 0, %s36
      %s40 = sphi 0, %s39
      %s56 = sphi 0, %s40
      %s62 = sphi 0, %s64
      %s65 = sphi 0, %s62
      %s66 = sphi 0, %s65
      %s82 = sphi 0, %s66
      %s88 = sphi 0, %s90
      %s91 = sphi 0, %s88
      %s92 = sphi 0, %s91
      %s108 = sphi 0, %s92
      %s114 = sphi 0, %s116
      %s117 = sphi 0, %s114
      %s118 = sphi 0, %s117
      %s134 = sphi 0, %s118
      %s138 = sphi 0, %s138
      %s140 = sphi 0, %s138
      %s141 = sphi 0, %s140
      %s155 = sphi 0, %s141
      %s159 = sphi 0, %s159
      %s161 = sphi 0, %s159
      %s162 = sphi 0, %s161
      %s176 = sphi 0, %s162
      %s180 = sphi 0, %s180
      %s182 = sphi 0, %s180
      %s183 = sphi 0, %s182
      %s197 = sphi 0, %s183
      %s203 = sphi 0, %s205
      %s206 = sphi 0, %s203
      %s207 = sphi 0, %s206
      %s223 = sphi 0, %s207
    $region4: #{encoder_layer.7} parent=1 // loop_header_branch
      %17 = sbr.rel (%p15) target = $region8
    $region5: #{encoder_layer.7} parent=1 // loop_body
      %s19 = ssub.s32 %s14, 1
      %s20 = ssub.s32 %s14, 2
      %s27 = sadd.s32 1, %s22
      %p28 = scmp.ge.s32.totalorder %s27, 2
      %s29 = scalar_select %p28, 0, %s27
      %s30 = sadd.s32 1, %s21
      %s31 = scalar_select %p28, %s30, %s21
      %p32 = scmp.ge.s32.totalorder %s31, 1
      %s33 = scalar_select %p32, 0, %s31
      %s34 = ssub.s32 %s21, %s33
      %p35 = scmp.eq.s32.totalorder %s34, 0
      %s37 = sadd.s32 %s36, 1
      %s38 = scalar_select %p35, %s36, %s37
      %p41 = pneg %p35
      %p42 = scmp.eq.s32.totalorder %s14, 1
      %p43 = por %p41, %p42
      %p44 = scmp.ne.s32.totalorder %s36, %s39
      %p45 = scmp.eq.s32.totalorder %s14, 0
      %p46 = por %p44, %p45
      %p47 = scmp.ne.s32.totalorder %s36, %s39
      %p48 = scmp.eq.s32.totalorder %s19, 1
      %p49 = por %p47, %p48
      %p50 = scmp.ne.s32.totalorder %s39, %s40
      %p51 = scmp.eq.s32.totalorder %s19, 0
      %p52 = por %p50, %p51
      %p53 = scmp.ne.s32.totalorder %s39, %s40
      %p54 = scmp.eq.s32.totalorder %s20, 1
      %p55 = por %p53, %p54
      %p57 = scmp.ne.s32.totalorder %s40, %s56
      %p58 = scmp.eq.s32.totalorder %s20, 0
      %p59 = por %p57, %p58
      %s60 = ssub.s32 %s22, %s29
      %p61 = scmp.eq.s32.totalorder %s60, 0
      %s63 = sadd.s32 %s62, 1
      %s64 = scalar_select %p61, %s62, %s63
      %p67 = pneg %p61
      %p68 = scmp.eq.s32.totalorder %s14, 1
      %p69 = por %p67, %p68
      %p70 = scmp.ne.s32.totalorder %s62, %s65
      %p71 = scmp.eq.s32.totalorder %s14, 0
      %p72 = por %p70, %p71
      %p73 = scmp.ne.s32.totalorder %s62, %s65
      %p74 = scmp.eq.s32.totalorder %s19, 1
      %p75 = por %p73, %p74
      %p76 = scmp.ne.s32.totalorder %s65, %s66
      %p77 = scmp.eq.s32.totalorder %s19, 0
      %p78 = por %p76, %p77
      %p79 = scmp.ne.s32.totalorder %s65, %s66
      %p80 = scmp.eq.s32.totalorder %s20, 1
      %p81 = por %p79, %p80
      %p83 = scmp.ne.s32.totalorder %s66, %s82
      %p84 = scmp.eq.s32.totalorder %s20, 0
      %p85 = por %p83, %p84
      %s86 = ssub.s32 %s22, %s29
      %p87 = scmp.eq.s32.totalorder %s86, 0
      %s89 = sadd.s32 %s88, 1
      %s90 = scalar_select %p87, %s88, %s89
      %p93 = pneg %p87
      %p94 = scmp.eq.s32.totalorder %s14, 1
      %p95 = por %p93, %p94
      %p96 = scmp.ne.s32.totalorder %s88, %s91
      %p97 = scmp.eq.s32.totalorder %s14, 0
      %p98 = por %p96, %p97
      %p99 = scmp.ne.s32.totalorder %s88, %s91
      %p100 = scmp.eq.s32.totalorder %s19, 1
      %p101 = por %p99, %p100
      %p102 = scmp.ne.s32.totalorder %s91, %s92
      %p103 = scmp.eq.s32.totalorder %s19, 0
      %p104 = por %p102, %p103
      %p105 = scmp.ne.s32.totalorder %s91, %s92
      %p106 = scmp.eq.s32.totalorder %s20, 1
      %p107 = por %p105, %p106
      %p109 = scmp.ne.s32.totalorder %s92, %s108
      %p110 = scmp.eq.s32.totalorder %s20, 0
      %p111 = por %p109, %p110
      %s112 = ssub.s32 %s22, %s29
      %p113 = scmp.eq.s32.totalorder %s112, 0
      %s115 = sadd.s32 %s114, 1
      %s116 = scalar_select %p113, %s114, %s115
      %p119 = pneg %p113
      %p120 = scmp.eq.s32.totalorder %s14, 1
      %p121 = por %p119, %p120
      %p122 = scmp.ne.s32.totalorder %s114, %s117
      %p123 = scmp.eq.s32.totalorder %s14, 0
      %p124 = por %p122, %p123
      %p125 = scmp.ne.s32.totalorder %s114, %s117
      %p126 = scmp.eq.s32.totalorder %s19, 1
      %p127 = por %p125, %p126
      %p128 = scmp.ne.s32.totalorder %s117, %s118
      %p129 = scmp.eq.s32.totalorder %s19, 0
      %p130 = por %p128, %p129
      %p131 = scmp.ne.s32.totalorder %s117, %s118
      %p132 = scmp.eq.s32.totalorder %s20, 1
      %p133 = por %p131, %p132
      %p135 = scmp.ne.s32.totalorder %s118, %s134
      %p136 = scmp.eq.s32.totalorder %s20, 0
      %p137 = por %p135, %p136
      %s139 = sadd.s32 %s138, 1
      %p142 = scmp.eq.s32.totalorder %s14, 1
      %p143 = scmp.ne.s32.totalorder %s138, %s140
      %p144 = scmp.eq.s32.totalorder %s14, 0
      %p145 = por %p143, %p144
      %p146 = scmp.ne.s32.totalorder %s138, %s140
      %p147 = scmp.eq.s32.totalorder %s19, 1
      %p148 = por %p146, %p147
      %p149 = scmp.ne.s32.totalorder %s140, %s141
      %p150 = scmp.eq.s32.totalorder %s19, 0
      %p151 = por %p149, %p150
      %p152 = scmp.ne.s32.totalorder %s140, %s141
      %p153 = scmp.eq.s32.totalorder %s20, 1
      %p154 = por %p152, %p153
      %p156 = scmp.ne.s32.totalorder %s141, %s155
      %p157 = scmp.eq.s32.totalorder %s20, 0
      %p158 = por %p156, %p157
      %s160 = sadd.s32 %s159, 1
      %p163 = scmp.eq.s32.totalorder %s14, 1
      %p164 = scmp.ne.s32.totalorder %s159, %s161
      %p165 = scmp.eq.s32.totalorder %s14, 0
      %p166 = por %p164, %p165
      %p167 = scmp.ne.s32.totalorder %s159, %s161
      %p168 = scmp.eq.s32.totalorder %s19, 1
      %p169 = por %p167, %p168
      %p170 = scmp.ne.s32.totalorder %s161, %s162
      %p171 = scmp.eq.s32.totalorder %s19, 0
      %p172 = por %p170, %p171
      %p173 = scmp.ne.s32.totalorder %s161, %s162
      %p174 = scmp.eq.s32.totalorder %s20, 1
      %p175 = por %p173, %p174
      %p177 = scmp.ne.s32.totalorder %s162, %s176
      %p178 = scmp.eq.s32.totalorder %s20, 0
      %p179 = por %p177, %p178
      %s181 = sadd.s32 %s180, 1
      %p184 = scmp.eq.s32.totalorder %s14, 1
      %p185 = scmp.ne.s32.totalorder %s180, %s182
      %p186 = scmp.eq.s32.totalorder %s14, 0
      %p187 = por %p185, %p186
      %p188 = scmp.ne.s32.totalorder %s180, %s182
      %p189 = scmp.eq.s32.totalorder %s19, 1
      %p190 = por %p188, %p189
      %p191 = scmp.ne.s32.totalorder %s182, %s183
      %p192 = scmp.eq.s32.totalorder %s19, 0
      %p193 = por %p191, %p192
      %p194 = scmp.ne.s32.totalorder %s182, %s183
      %p195 = scmp.eq.s32.totalorder %s20, 1
      %p196 = por %p194, %p195
      %p198 = scmp.ne.s32.totalorder %s183, %s197
      %p199 = scmp.eq.s32.totalorder %s20, 0
      %p200 = por %p198, %p199
      %s201 = ssub.s32 %s21, %s33
      %p202 = scmp.eq.s32.totalorder %s201, 0
      %s204 = sadd.s32 %s203, 1
      %s205 = scalar_select %p202, %s203, %s204
      %p208 = pneg %p202
      %p209 = scmp.eq.s32.totalorder %s14, 1
      %p210 = por %p208, %p209
      %p211 = scmp.ne.s32.totalorder %s203, %s206
      %p212 = scmp.eq.s32.totalorder %s14, 0
      %p213 = por %p211, %p212
      %p214 = scmp.ne.s32.totalorder %s203, %s206
      %p215 = scmp.eq.s32.totalorder %s19, 1
      %p216 = por %p214, %p215
      %p217 = scmp.ne.s32.totalorder %s206, %s207
      %p218 = scmp.eq.s32.totalorder %s19, 0
      %p219 = por %p217, %p218
      %p220 = scmp.ne.s32.totalorder %s206, %s207
      %p221 = scmp.eq.s32.totalorder %s20, 1
      %p222 = por %p220, %p221
      %p224 = scmp.ne.s32.totalorder %s207, %s223
      %p225 = scmp.eq.s32.totalorder %s20, 0
      %p226 = por %p224, %p225
      %p227 = scmp.le.s32.totalorder 1, %s14
      %p228 = scmp.lt.s32.totalorder %s14, 3
      %p229 = pnand %p227, %p228
      %p230 = pneg %p229
      // Predicated region
      $region9: #{encoder_layer.7} parent=5 // pred_check
        _
      $region10: #{encoder_layer.7} parent=5 // pred_check_branch
        %232 = sbr.rel (%p229) target = $region12
      $region11: #{encoder_layer.7} parent=5 // pred_region
        %s233 = ssub.s32 %s14, 1
        // Predicated region
        $region13: #{encoder_layer.7} parent=11 // pred_check
          %p234 = pneg %p52
        $region14: #{encoder_layer.7} parent=11 // pred_check_branch
          %236 = sbr.rel (%p234) target = $region16
        $region15: #{encoder_layer.7} parent=11 // pred_region
          %s237 = smul.u32 2, %s23
          %p238 = scmp.lt.s32.totalorder %s237, 1
          %s239 = scalar_select %p238, %s237, 1
          %s240 = smul.addr %s239, 4
          %s241 = scalar_lea.vmem %s0, %s240
          %s242 = smul.u32 2, %s23
        $region16: #{encoder_layer.7} parent=11 // pred_fallthru
          _
        // Predicated region
        $region17: #{encoder_layer.7} parent=11 // pred_check
          %p243 = pneg %p151
        $region18: #{encoder_layer.7} parent=11 // pred_check_branch
          %245 = sbr.rel (%p243) target = $region20
        $region19: #{encoder_layer.7} parent=11 // pred_region
          _
        $region20: #{encoder_layer.7} parent=11 // pred_fallthru
          _
        // Predicated region
        $region21: #{encoder_layer.7} parent=11 // pred_check
          %p246 = pneg %p172
        $region22: #{encoder_layer.7} parent=11 // pred_check_branch
          %248 = sbr.rel (%p246) target = $region24
        $region23: #{encoder_layer.7} parent=11 // pred_region
          _
        $region24: #{encoder_layer.7} parent=11 // pred_fallthru
          _
        // Predicated region
        $region25: #{encoder_layer.7} parent=11 // pred_check
          %p249 = pneg %p193
        $region26: #{encoder_layer.7} parent=11 // pred_check_branch
          %251 = sbr.rel (%p249) target = $region28
        $region27: #{encoder_layer.7} parent=11 // pred_region
          _
        $region28: #{encoder_layer.7} parent=11 // pred_fallthru
          _
      $region12: #{encoder_layer.7} parent=5 // pred_fallthru
        _
      %p252 = scmp.lt.s32.totalorder %s14, 2
      // Predicated region
      $region29: #{encoder_layer.7} parent=5 // pred_check
        %p253 = pneg %p252
      $region30: #{encoder_layer.7} parent=5 // pred_check_branch
        %255 = sbr.rel (%p253) target = $region32
      $region31: #{encoder_layer.7} parent=5 // pred_region
        // Predicated region
        $region33: #{encoder_layer.7} parent=31 // pred_check
          %p256 = pneg %p72
        $region34: #{encoder_layer.7} parent=31 // pred_check_branch
          %258 = sbr.rel (%p256) target = $region36
        $region35: #{encoder_layer.7} parent=31 // pred_region
          %s259 = sand.u32 %s62, 1
          %s260 = sand.u32 %s62, 1
          %s261 = smul.addr %s260, 64
          %s262 = scalar_lea.vmem [#allocation3], %s261
          %s263 = smul.addr %s22, 4
          %s264 = scalar_lea.vmem %s1, %s263
          // Predicated region
          $region37: #{encoder_layer.7} parent=35 // pred_check
            _
          $region38: #{encoder_layer.7} parent=35 // pred_check_branch
            %266 = sbr.rel (0) target = $region40
          $region39: #{encoder_layer.7} parent=35 // pred_region
            // Predicated region
            $region41: #{encoder_layer.7} parent=39 // pred_check
              _
            $region42: #{encoder_layer.7} parent=39 // pred_check_branch
              %268 = sbr.rel target = $region44
            $region43: #{encoder_layer.7} parent=39 // pred_region
              // Predicated region
              $region56: #{encoder_layer.7} parent=43 // pred_check
                _
              $region57: #{encoder_layer.7} parent=43 // pred_check_branch
                %314 = sbr.rel (0) target = $region59
              $region58: #{encoder_layer.7} parent=43 // pred_region
                loop: start=0, step=1, limit=1
                $region60: #{encoder_layer.7} parent=58 // loop_pre_header
                  _
                $region61: #{encoder_layer.7} parent=58 // loop_header
                  %s316 = sphi 0, %s320
                  %p317 = scmp.ge.s32.totalorder %s316, 1
                  %s321 = sphi %s264, %s264
                  %s322 = sphi %s262, %s262
                $region62: #{encoder_layer.7} parent=58 // loop_header_branch
                  %319 = sbr.rel (%p317) target = $region66
                $region63: #{encoder_layer.7} parent=58 // loop_body
                  _
                $region64: #{encoder_layer.7} parent=58 // loop_footer
                  %s320 = sadd.s32 1, %s316
                $region65: #{encoder_layer.7} parent=58 // loop_footer_branch
                  %315 = sbr.rel target = $region61
                $region66: #{encoder_layer.7} parent=58 // loop_exit
                  _
                %s324 = ssub.s32 16, 1
                loop: start=0, step=1, limit=1
                $region67: #{encoder_layer.7} parent=58 // loop_pre_header
                  _
                $region68: #{encoder_layer.7} parent=58 // loop_header
                  %s326 = sphi 0, %s330
                  %p327 = scmp.ge.s32.totalorder %s326, 1
                  %s331 = sphi %s264, %s264
                  %s332 = sphi %s262, %s262
                $region69: #{encoder_layer.7} parent=58 // loop_header_branch
                  %329 = sbr.rel (%p327) target = $region73
                $region70: #{encoder_layer.7} parent=58 // loop_body
                  %v333 = vld [vmem:[%s331] sm:%s324]
                  %334 = vst [vmem:[%s332] sm:%s324] %v333
                  %v335 = vld [vmem:[%s331 + $0x8] sm:%s324]
                  %336 = vst [vmem:[%s332 + $0x4] sm:%s324] %v335
                  %v337 = vld [vmem:[%s331 + $0x10] sm:%s324]
                  %338 = vst [vmem:[%s332 + $0x8] sm:%s324] %v337
                  %v339 = vld [vmem:[%s331 + $0x18] sm:%s324]
                  %340 = vst [vmem:[%s332 + $0xc] sm:%s324] %v339
                  %v341 = vld [vmem:[%s331 + $0x20] sm:%s324]
                  %342 = vst [vmem:[%s332 + $0x10] sm:%s324] %v341
                  %v343 = vld [vmem:[%s331 + $0x28] sm:%s324]
                  %344 = vst [vmem:[%s332 + $0x14] sm:%s324] %v343
                  %v345 = vld [vmem:[%s331 + $0x30] sm:%s324]
                  %346 = vst [vmem:[%s332 + $0x18] sm:%s324] %v345
                  %v347 = vld [vmem:[%s331 + $0x38] sm:%s324]
                  %348 = vst [vmem:[%s332 + $0x1c] sm:%s324] %v347
                  %v349 = vld [vmem:[%s331 + $0x40] sm:%s324]
                  %350 = vst [vmem:[%s332 + $0x20] sm:%s324] %v349
                  %v351 = vld [vmem:[%s331 + $0x48] sm:%s324]
                  %352 = vst [vmem:[%s332 + $0x24] sm:%s324] %v351
                  %v353 = vld [vmem:[%s331 + $0x50] sm:%s324]
                  %354 = vst [vmem:[%s332 + $0x28] sm:%s324] %v353
                  %v355 = vld [vmem:[%s331 + $0x58] sm:%s324]
                  %356 = vst [vmem:[%s332 + $0x2c] sm:%s324] %v355
                  %v357 = vld [vmem:[%s331 + $0x60] sm:%s324]
                  %358 = vst [vmem:[%s332 + $0x30] sm:%s324] %v357
                  %v359 = vld [vmem:[%s331 + $0x68] sm:%s324]
                  %360 = vst [vmem:[%s332 + $0x34] sm:%s324] %v359
                  %v361 = vld [vmem:[%s331 + $0x70] sm:%s324]
                  %362 = vst [vmem:[%s332 + $0x38] sm:%s324] %v361
                  %v363 = vld [vmem:[%s331 + $0x78] sm:%s324]
                  %364 = vst [vmem:[%s332 + $0x3c] sm:%s324] %v363
                $region71: #{encoder_layer.7} parent=58 // loop_footer
                  %s330 = sadd.s32 1, %s326
                $region72: #{encoder_layer.7} parent=58 // loop_footer_branch
                  %325 = sbr.rel target = $region68
                $region73: #{encoder_layer.7} parent=58 // loop_exit
                  _
              $region59: #{encoder_layer.7} parent=43 // pred_fallthru
                _
            $region44: #{encoder_layer.7} parent=39 // pred_fallthru
              _
            // Predicated region
            $region45: #{encoder_layer.7} parent=39 // pred_check
              _
            $region46: #{encoder_layer.7} parent=39 // pred_check_branch
              %270 = sbr.rel (0) target = $region48
            $region47: #{encoder_layer.7} parent=39 // pred_region
              %s272 = ssub.s32 16, 1
              loop: start=0, step=1, limit=1
              $region49: #{encoder_layer.7} parent=47 // loop_pre_header
                _
              $region50: #{encoder_layer.7} parent=47 // loop_header
                %s274 = sphi 0, %s278
                %p275 = scmp.ge.s32.totalorder %s274, 1
                %s279 = sphi %s264, %s264
                %s280 = sphi %s262, %s262
              $region51: #{encoder_layer.7} parent=47 // loop_header_branch
                %277 = sbr.rel (%p275) target = $region55
              $region52: #{encoder_layer.7} parent=47 // loop_body
                %v281 = vld [vmem:[%s279] sm:%s272]
                %282 = vst [vmem:[%s280] sm:%s272] %v281
                %v283 = vld [vmem:[%s279 + $0x8] sm:%s272]
                %284 = vst [vmem:[%s280 + $0x4] sm:%s272] %v283
                %v285 = vld [vmem:[%s279 + $0x10] sm:%s272]
                %286 = vst [vmem:[%s280 + $0x8] sm:%s272] %v285
                %v287 = vld [vmem:[%s279 + $0x18] sm:%s272]
                %288 = vst [vmem:[%s280 + $0xc] sm:%s272] %v287
                %v289 = vld [vmem:[%s279 + $0x20] sm:%s272]
                %290 = vst [vmem:[%s280 + $0x10] sm:%s272] %v289
                %v291 = vld [vmem:[%s279 + $0x28] sm:%s272]
                %292 = vst [vmem:[%s280 + $0x14] sm:%s272] %v291
                %v293 = vld [vmem:[%s279 + $0x30] sm:%s272]
                %294 = vst [vmem:[%s280 + $0x18] sm:%s272] %v293
                %v295 = vld [vmem:[%s279 + $0x38] sm:%s272]
                %296 = vst [vmem:[%s280 + $0x1c] sm:%s272] %v295
                %v297 = vld [vmem:[%s279 + $0x40] sm:%s272]
                %298 = vst [vmem:[%s280 + $0x20] sm:%s272] %v297
                %v299 = vld [vmem:[%s279 + $0x48] sm:%s272]
                %300 = vst [vmem:[%s280 + $0x24] sm:%s272] %v299
                %v301 = vld [vmem:[%s279 + $0x50] sm:%s272]
                %302 = vst [vmem:[%s280 + $0x28] sm:%s272] %v301
                %v303 = vld [vmem:[%s279 + $0x58] sm:%s272]
                %304 = vst [vmem:[%s280 + $0x2c] sm:%s272] %v303
                %v305 = vld [vmem:[%s279 + $0x60] sm:%s272]
                %306 = vst [vmem:[%s280 + $0x30] sm:%s272] %v305
                %v307 = vld [vmem:[%s279 + $0x68] sm:%s272]
                %308 = vst [vmem:[%s280 + $0x34] sm:%s272] %v307
                %v309 = vld [vmem:[%s279 + $0x70] sm:%s272]
                %310 = vst [vmem:[%s280 + $0x38] sm:%s272] %v309
                %v311 = vld [vmem:[%s279 + $0x78] sm:%s272]
                %312 = vst [vmem:[%s280 + $0x3c] sm:%s272] %v311
              $region53: #{encoder_layer.7} parent=47 // loop_footer
                %s278 = sadd.s32 1, %s274
              $region54: #{encoder_layer.7} parent=47 // loop_footer_branch
                %273 = sbr.rel target = $region50
              $region55: #{encoder_layer.7} parent=47 // loop_exit
                _
            $region48: #{encoder_layer.7} parent=39 // pred_fallthru
              _
          $region40: #{encoder_layer.7} parent=35 // pred_fallthru
            _
          %365 = vnop
        $region36: #{encoder_layer.7} parent=31 // pred_fallthru
          _
        // Predicated region
        $region74: #{encoder_layer.7} parent=31 // pred_check
          %p366 = pneg %p98
        $region75: #{encoder_layer.7} parent=31 // pred_check_branch
          %368 = sbr.rel (%p366) target = $region77
        $region76: #{encoder_layer.7} parent=31 // pred_region
          %p369 = scmp.lt.s32.totalorder %s22, 1
          %s370 = scalar_select %p369, %s22, 1
          %s371 = scalar_lea.vmem %s2, %s370
        $region77: #{encoder_layer.7} parent=31 // pred_fallthru
          _
        // Predicated region
        $region78: #{encoder_layer.7} parent=31 // pred_check
          %p372 = pneg %p124
        $region79: #{encoder_layer.7} parent=31 // pred_check_branch
          %374 = sbr.rel (%p372) target = $region81
        $region80: #{encoder_layer.7} parent=31 // pred_region
          %s375 = smul.u32 16, %s22
          %p376 = scmp.lt.s32.totalorder %s375, 31
          %s377 = scalar_select %p376, %s375, 31
          %s378 = smul.addr %s377, 4
          %s379 = scalar_lea.vmem %s3, %s378
          %s380 = smul.u32 16, %s22
        $region81: #{encoder_layer.7} parent=31 // pred_fallthru
          _
      $region32: #{encoder_layer.7} parent=5 // pred_fallthru
        _
      %p381 = scmp.le.s32.totalorder 1, %s14
      %p382 = scmp.lt.s32.totalorder %s14, 3
      %p383 = pnand %p381, %p382
      %p384 = pneg %p383
      // Predicated region
      $region82: #{encoder_layer.7} parent=5 // pred_check
        _
      $region83: #{encoder_layer.7} parent=5 // pred_check_branch
        %386 = sbr.rel (%p383) target = $region85
      $region84: #{encoder_layer.7} parent=5 // pred_region
        %s387 = ssub.s32 %s14, 1
        %s388 = sand.u32 %s65, 1
        %s389 = sand.u32 %s65, 1
        %s390 = smul.addr %s389, 64
        %s391 = scalar_lea.vmem [#allocation3], %s390
        // Predicated region
        $region86: #{encoder_layer.7} parent=84 // pred_check
          %p392 = pneg %p78
        $region87: #{encoder_layer.7} parent=84 // pred_check_branch
          %394 = sbr.rel (%p392) target = $region89
        $region88: #{encoder_layer.7} parent=84 // pred_region
          _
        $region89: #{encoder_layer.7} parent=84 // pred_fallthru
          _
        %s395 = smul.u32 2, %s23
        %p396 = scmp.lt.s32.totalorder %s395, 1
        %s397 = scalar_select %p396, %s395, 1
        %s398 = smul.addr %s397, 4
        %s399 = scalar_lea.vmem %s0, %s398
        %p400 = pneg %p52
        %p401 = pneg %p49
        %s402 = sand.u32 %s65, 1
        %s403 = sand.u32 %s65, 1
        %s404 = smul.addr %s403, 64
        %s405 = scalar_lea.vmem [#allocation3], %s404
        %p406 = pneg %p78
        %p407 = pneg %p75
        %p408 = scmp.lt.s32.totalorder %s24, 1
        %s409 = scalar_select %p408, %s24, 1
        %s410 = scalar_lea.vmem %s2, %s409
        %p411 = pneg %p104
        %p412 = pneg %p101
        %s413 = smul.u32 16, %s24
        %p414 = scmp.lt.s32.totalorder %s413, 31
        %s415 = scalar_select %p414, %s413, 31
        %s416 = smul.addr %s415, 4
        %s417 = scalar_lea.vmem %s3, %s416
        %p418 = pneg %p130
        %p419 = pneg %p127
        %p420 = pneg %p151
        %p421 = pneg %p148
        %p422 = pneg %p172
        %p423 = pneg %p169
        %p424 = pneg %p193
        %p425 = pneg %p190
        %p426 = pneg %p219
        %p427 = pneg %p216
        %s428 = smul.u32 2, %s23
        %p429 = scmp.lt.s32.totalorder %s428, 1
        %s430 = scalar_select %p429, %s428, 1
        %s431 = smul.addr %s430, 4
        %s432 = scalar_lea.vmem %s0, %s431
        %s433 = smul.u32 2, %s23
        %p434 = scmp.lt.s32.totalorder %s24, 1
        %s435 = scalar_select %p434, %s24, 1
        %s436 = scalar_lea.vmem %s2, %s435
        %s437 = smul.u32 16, %s24
        %p438 = scmp.lt.s32.totalorder %s437, 31
        %s439 = scalar_select %p438, %s437, 31
        %s440 = smul.addr %s439, 4
        %s441 = scalar_lea.vmem %s3, %s440
        %s442 = smul.u32 16, %s24
        %s443 = smul.u32 2, %s23
        %p444 = scmp.eq.s32.totalorder %s24, 0
        // Predicated region
        $region90: #{encoder_layer.7} parent=84 // pred_check
          %p445 = pneg %p444
        $region91: #{encoder_layer.7} parent=84 // pred_check_branch
          %447 = sbr.rel (%p445) target = $region93
        $region92: #{encoder_layer.7} parent=84 // pred_region
          %448 = vst [vmem:[#allocation2] sm:$0xff] 0.0
          %449 = vst [vmem:[#allocation2 + $0x8] sm:$0xff] 0.0
        $region93: #{encoder_layer.7} parent=84 // pred_fallthru
          _
        %v450 = vld [vmem:[%s432] sm:$0xf]
        %v451 = vld [vmem:[%s432 + $0x4] sm:$0xf]
        %v452 = vld [vmem:[%s391] sm:$0xf]
        %v453 = vld [vmem:[%s391 + $0x4] sm:$0xf]
        %v454 = vld [vmem:[%s391 + $0x8] sm:$0xf]
        %v455 = vld [vmem:[%s391 + $0xc] sm:$0xf]
        %v456 = vld [vmem:[%s391 + $0x10] sm:$0xf]
        %v457 = vld [vmem:[%s391 + $0x14] sm:$0xf]
        %v458 = vld [vmem:[%s391 + $0x18] sm:$0xf]
        %v459 = vld [vmem:[%s391 + $0x1c] sm:$0xf]
        %v460 = vld [vmem:[%s391 + $0x20] sm:$0xf]
        %v461 = vld [vmem:[%s391 + $0x24] sm:$0xf]
        %v462 = vld [vmem:[%s391 + $0x28] sm:$0xf]
        %v463 = vld [vmem:[%s391 + $0x2c] sm:$0xf]
        %v464 = vld [vmem:[%s391 + $0x30] sm:$0xf]
        %v465 = vld [vmem:[%s391 + $0x34] sm:$0xf]
        %v466 = vld [vmem:[%s391 + $0x38] sm:$0xf]
        %v467 = vld [vmem:[%s391 + $0x3c] sm:$0xf]
        %v468 = vld [vmem:[%s436] sm:$0x1]
        %v470 = vperm.slane %v468, 0
        %v474 = vunpack.c.l.b16 %v450
        %v475 = vunpack.c.l.b16 %v451
        %v476 = vpack.c.b16 %v475, %v474
        %v494 = vunpack.c.l.b16 %v452
        %v495 = vunpack.c.l.b16 %v453
        %v496 = vunpack.c.l.b16 %v454
        %v497 = vunpack.c.l.b16 %v455
        %v498 = vunpack.c.l.b16 %v456
        %v499 = vunpack.c.l.b16 %v457
        %v500 = vunpack.c.l.b16 %v458
        %v501 = vunpack.c.l.b16 %v459
        %v502 = vunpack.c.l.b16 %v460
        %v503 = vunpack.c.l.b16 %v461
        %v504 = vunpack.c.l.b16 %v462
        %v505 = vunpack.c.l.b16 %v463
        %v506 = vunpack.c.l.b16 %v464
        %v507 = vunpack.c.l.b16 %v465
        %v508 = vunpack.c.l.b16 %v466
        %v509 = vunpack.c.l.b16 %v467
        %v510 = vpack.c.b16 %v495, %v494
        %v511 = vpack.c.b16 %v497, %v496
        %v512 = vpack.c.b16 %v499, %v498
        %v513 = vpack.c.b16 %v501, %v500
        %v514 = vpack.c.b16 %v503, %v502
        %v515 = vpack.c.b16 %v505, %v504
        %v516 = vpack.c.b16 %v507, %v506
        %v517 = vpack.c.b16 %v509, %v508
        %526 = vmatpush.bf16.msra.mxu0 %v517
        %527 = vmatpush.bf16.msra.mxu0 %v516
        %528 = vmatpush.bf16.msra.mxu0 %v515
        %529 = vmatpush.bf16.msra.mxu0 %v514
        %530 = vmatpush.bf16.msra.mxu0 %v513
        %531 = vmatpush.bf16.msra.mxu0 %v512
        %532 = vmatpush.bf16.msra.mxu0 %v511
        %533 = vmatpush.bf16.msra.mxu0 %v510
        %534 = vmatmul.bf16.gmra.mxu0 %v476
        %v535 = vpop.f32.mrf.mxu0
        %v536 = vadd.f32 %v470, %v535
        %v537 = vpop.f32.mrf.mxu0
        %v538 = vadd.f32 %v470, %v537
        %539 = vdwg.mxu0
        %v540 = vmax.f32 %v536, 0.0
        %v541 = vmax.f32 %v538, 0.0
        %v542 = vld [vmem:[#allocation2] sm:$0xff]
        %v543 = vld [vmem:[#allocation2 + $0x8] sm:$0xff]
        %v544 = vpack.c.bf16 %v541, %v540
        %v545 = vld [vmem:[%s441] sm:$0xf]
        %v546 = vld [vmem:[%s441 + $0x4] sm:$0xf]
        %v547 = vld [vmem:[%s441 + $0x8] sm:$0xf]
        %v548 = vld [vmem:[%s441 + $0xc] sm:$0xf]
        %v549 = vld [vmem:[%s441 + $0x10] sm:$0xf]
        %v550 = vld [vmem:[%s441 + $0x14] sm:$0xf]
        %v551 = vld [vmem:[%s441 + $0x18] sm:$0xf]
        %v552 = vld [vmem:[%s441 + $0x1c] sm:$0xf]
        %v553 = vld [vmem:[%s441 + $0x20] sm:$0xf]
        %v554 = vld [vmem:[%s441 + $0x24] sm:$0xf]
        %v555 = vld [vmem:[%s441 + $0x28] sm:$0xf]
        %v556 = vld [vmem:[%s441 + $0x2c] sm:$0xf]
        %v557 = vld [vmem:[%s441 + $0x30] sm:$0xf]
        %v558 = vld [vmem:[%s441 + $0x34] sm:$0xf]
        %v559 = vld [vmem:[%s441 + $0x38] sm:$0xf]
        %v560 = vld [vmem:[%s441 + $0x3c] sm:$0xf]
        %v577 = vunpack.c.l.b16 %v545
        %v578 = vunpack.c.l.b16 %v546
        %v579 = vunpack.c.l.b16 %v547
        %v580 = vunpack.c.l.b16 %v548
        %v581 = vunpack.c.l.b16 %v549
        %v582 = vunpack.c.l.b16 %v550
        %v583 = vunpack.c.l.b16 %v551
        %v584 = vunpack.c.l.b16 %v552
        %v585 = vunpack.c.l.b16 %v553
        %v586 = vunpack.c.l.b16 %v554
        %v587 = vunpack.c.l.b16 %v555
        %v588 = vunpack.c.l.b16 %v556
        %v589 = vunpack.c.l.b16 %v557
        %v590 = vunpack.c.l.b16 %v558
        %v591 = vunpack.c.l.b16 %v559
        %v592 = vunpack.c.l.b16 %v560
        %v593 = vpack.c.b16 %v578, %v577
        %v594 = vpack.c.b16 %v580, %v579
        %v595 = vpack.c.b16 %v582, %v581
        %v596 = vpack.c.b16 %v584, %v583
        %v597 = vpack.c.b16 %v586, %v585
        %v598 = vpack.c.b16 %v588, %v587
        %v599 = vpack.c.b16 %v590, %v589
        %v600 = vpack.c.b16 %v592, %v591
        %609 = vmatpush.bf16.msra.mxu0 %v600
        %610 = vmatpush.bf16.msra.mxu0 %v599
        %611 = vmatpush.bf16.msra.mxu0 %v598
        %612 = vmatpush.bf16.msra.mxu0 %v597
        %613 = vmatpush.bf16.msra.mxu0 %v596
        %614 = vmatpush.bf16.msra.mxu0 %v595
        %615 = vmatpush.bf16.msra.mxu0 %v594
        %616 = vmatpush.bf16.msra.mxu0 %v593
        %617 = vmatmul.bf16.gmra.mxu0 %v544
        %v618 = vpop.f32.mrf.mxu0
        %v619 = vadd.f32 0.0, %v618
        %v620 = vpop.f32.mrf.mxu0
        %v621 = vadd.f32 0.0, %v620
        %622 = vdwg.mxu0
        %v623 = vadd.f32 %v542, %v619
        %v624 = vadd.f32 %v543, %v621
        %625 = vst [vmem:[#allocation2] sm:$0xff] %v623
        %626 = vst [vmem:[#allocation2 + $0x8] sm:$0xff] %v624
        %p627 = scmp.eq.s32.totalorder %s24, 1
        // Predicated region
        $region94: #{encoder_layer.7} parent=84 // pred_check
          %p628 = pneg %p627
        $region95: #{encoder_layer.7} parent=84 // pred_check_branch
          %630 = sbr.rel (%p628) target = $region97
        $region96: #{encoder_layer.7} parent=84 // pred_region
          %v631 = vld [vmem:[#allocation2] sm:$0xff]
          %v632 = vld [vmem:[#allocation2 + $0x8] sm:$0xff]
          %v633 = vld [vmem:[%s4] sm:$0x1]
          %v635 = vperm.slane %v633, 0
          %v637 = vadd.f32 %v631, %v635
          %v638 = vadd.f32 %v632, %v635
          %v639 = vld [vmem:[%s432] sm:$0xf]
          %v640 = vld [vmem:[%s432 + $0x4] sm:$0xf]
          %v641 = vunpack.c.l.bf16 %v639
          %v642 = vunpack.c.l.bf16 %v640
          %v643 = vadd.f32 %v637, %v641
          %v644 = vadd.f32 %v638, %v642
          %v645 = vld [vmem:[%s5] sm:$0x1]
          %v646 = vld [vmem:[%s6] sm:$0x1]
          %647 = vadd.xlane.f32.xlu0 %v643
          %v648 = vpop.xlane.xlu0 %647
          %649 = vadd.xlane.f32.xlu0 %v644
          %v650 = vpop.xlane.xlu0 %649
          %v651 = vrcp.pop 128.0
          %v652 = vmul.f32 128.0, %v651
          %v653 = vsub.f32 1.0, %v652
          %v654 = vmul.f32 %v651, %v653
          %v655 = vadd.f32 %v651, %v654
          %vm656 = vweird.f32 %v651
          %v657 = vsel %vm656, %v651, %v655
          %v658 = vmul.f32 %v648, %v657
          %v659 = vmul.f32 %v650, %v657
          %v660 = vsub.f32 %v643, %v658
          %v661 = vsub.f32 %v644, %v659
          %v662 = vmul.f32 %v660, %v660
          %v663 = vmul.f32 %v661, %v661
          %664 = vadd.xlane.f32.xlu0 %v662
          %v665 = vpop.xlane.xlu0 %664
          %666 = vadd.xlane.f32.xlu0 %v663
          %v667 = vpop.xlane.xlu0 %666
          %v668 = vmul.f32 %v665, %v657
          %v669 = vmul.f32 %v667, %v657
          %v670 = vadd.f32 %v668, 1e-05
          %v671 = vadd.f32 %v669, 1e-05
          %v672 = vrsqrt.pop %v670
          %v673 = vmul.f32 %v672, %v670
          %v674 = vmul.f32 %v673, %v672
          %v675 = vmul.f32 0.5, %v674
          %v676 = vsub.f32 1.5, %v675
          %v677 = vmul.f32 %v672, %v676
          %vm678 = vweird.f32 %v670
          %vm679 = vweird.f32 %v672
          %vm680 = vmor %vm678, %vm679
          %v681 = vsel %vm680, %v672, %v677
          %v682 = vrsqrt.pop %v671
          %v683 = vmul.f32 %v682, %v671
          %v684 = vmul.f32 %v683, %v682
          %v685 = vmul.f32 0.5, %v684
          %v686 = vsub.f32 1.5, %v685
          %v687 = vmul.f32 %v682, %v686
          %vm688 = vweird.f32 %v671
          %vm689 = vweird.f32 %v682
          %vm690 = vmor %vm688, %vm689
          %v691 = vsel %vm690, %v682, %v687
          %v692 = vmul.f32 %v660, %v681
          %v693 = vmul.f32 %v661, %v691
          %v695 = vperm.slane %v645, 0
          %v697 = vmul.f32 %v695, %v692
          %v698 = vmul.f32 %v695, %v693
          %v700 = vperm.slane %v646, 0
          %v702 = vadd.f32 %v697, %v700
          %v703 = vadd.f32 %v698, %v700
          %704 = vst [vmem:[#allocation4] sm:$0xff] %v702
          %705 = vst [vmem:[#allocation4 + $0x8] sm:$0xff] %v703
        $region97: #{encoder_layer.7} parent=84 // pred_fallthru
          _
        // Predicated region
        $region98: #{encoder_layer.7} parent=84 // pred_check
          %p706 = pneg %p216
        $region99: #{encoder_layer.7} parent=84 // pred_check_branch
          %708 = sbr.rel (%p706) target = $region101
        $region100: #{encoder_layer.7} parent=84 // pred_region
          %s709 = smul.u32 2, %s23
          %711 = vsyncadd [#allocation5], 0
          %s712 = smul.addr %s709, 8
          %s713 = scalar_lea.hbm %s7, %s712
          %s714 = sshll.u32 [#allocation4], 4
          %s715 = int_to_ptr.vmem [resolvable:$true] %s714
          %s716 = sshll.u32 %s713, 4
          %s717 = int_to_ptr.hbm [resolvable:$true] %s716
          %722 = dma.vmem_to_hbm [thread:$0]  %s715, 256, %s717, [#allocation5], 128, 128, 8
        $region101: #{encoder_layer.7} parent=84 // pred_fallthru
          _
        // Predicated region
        $region102: #{encoder_layer.7} parent=84 // pred_check
          %p723 = pneg %p216
        $region103: #{encoder_layer.7} parent=84 // pred_check_branch
          %725 = sbr.rel (%p723) target = $region105
        $region104: #{encoder_layer.7} parent=84 // pred_region
          %727 = dma.done [#allocation5], 256
        $region105: #{encoder_layer.7} parent=84 // pred_fallthru
          _
      $region85: #{encoder_layer.7} parent=5 // pred_fallthru
        _
      %p728 = scmp.le.s32.totalorder 2, %s14
      // Predicated region
      $region106: #{encoder_layer.7} parent=5 // pred_check
        %p729 = pneg %p728
      $region107: #{encoder_layer.7} parent=5 // pred_check_branch
        %731 = sbr.rel (%p729) target = $region109
      $region108: #{encoder_layer.7} parent=5 // pred_region
        %s732 = ssub.s32 %s14, 2
      $region109: #{encoder_layer.7} parent=5 // pred_fallthru
        _
    $region6: #{encoder_layer.7} parent=1 // loop_footer
      %s18 = sadd.s32 1, %s14
    $region7: #{encoder_layer.7} parent=1 // loop_footer_branch
      %13 = sbr.rel target = $region3
    $region8: #{encoder_layer.7} parent=1 // loop_exit
      _
    %733 = vsyncpa [#allocation5], 1
    %s734 = scalar_lea.sflag [#allocation5], 1
    %735 = vsyncpa %s734, 1

</llo_original>
